<compile_context>
chip_gen: v7x
topology: tpu7x:2x2x1
jax: 0.10.0
libtpu: 0.0.40
codegen_flags: <defaults>
</compile_context>

<pallas_src>
import functools

import jax
import jax.numpy as jnp
from jax import lax
from jax.experimental import pallas as pl
from jax.experimental.pallas import tpu as pltpu


def _round_up(x, m):
    return (x + m - 1) // m * m


def _lstm_kernel(x_ref, w_ih_ref, w_hh_ref, b_ref, w_cls_ref, b_cls_ref,
                 out_ref, h_scr, c_scr, *, seq_len, unroll):
    """Grid = (batch_tiles ["parallel"], time_chunks ["arbitrary"]).

    x_ref is one time-chunk of one batch tile, time-major: (t_chunk, b_tile, F) bf16.
    h_scr / c_scr hold the f32 LSTM state for this batch tile across time chunks.
    """
    chunk = pl.program_id(1)
    t_chunk = x_ref.shape[0]
    bp, hp = h_scr.shape                      # (b_tile, h_pad)

    @pl.when(chunk == 0)
    def _():
        h_scr[...] = jnp.zeros_like(h_scr)
        c_scr[...] = jnp.zeros_like(c_scr)

    # Load weights once per grid step; hoist the bias broadcast out of the loop
    # (JAX does not CSE broadcast_in_dim - leaving it in the body re-emits it per
    #  unrolled iteration).
    w_ih = w_ih_ref[...]                      # (F, 4*h_pad) bf16
    w_hh = w_hh_ref[...]                      # (h_pad, 4*h_pad) bf16
    bias = jnp.broadcast_to(b_ref[...], (bp, 4 * hp))   # f32

    def step(t, carry):
        h, c = carry
        x_t = x_ref[t]                        # (b_tile, F) bf16, cheap leading-dim index
        gates = (
            jnp.dot(x_t, w_ih, preferred_element_type=jnp.float32)
            + jnp.dot(h.astype(jnp.bfloat16), w_hh,
                      preferred_element_type=jnp.float32)
            + bias)
        # PyTorch gate order i, f, g, o; every slice is 128-lane aligned.
        i_g = jax.nn.sigmoid(gates[:, 0 * hp:1 * hp])
        f_g = jax.nn.sigmoid(gates[:, 1 * hp:2 * hp])
        g_g = jnp.tanh(gates[:, 2 * hp:3 * hp])
        o_g = jax.nn.sigmoid(gates[:, 3 * hp:4 * hp])
        c_new = f_g * c + i_g * g_g
        h_new = o_g * jnp.tanh(c_new)
        if seq_len % t_chunk != 0:   # static: only lowered if a padded time tail exists
            keep = (chunk * t_chunk + t) < seq_len
            h_new = jnp.where(keep, h_new, h)
            c_new = jnp.where(keep, c_new, c)
        return h_new, c_new

    h, c = lax.fori_loop(0, t_chunk, step, (h_scr[...], c_scr[...]),
                         unroll=unroll)
    h_scr[...] = h
    c_scr[...] = c

    # Classifier on the final hidden state (== batch_first_output[:, -1]).
    @pl.when(chunk == pl.num_programs(1) - 1)
    def _():
        out_ref[...] = (
            jnp.dot(h.astype(jnp.bfloat16), w_cls_ref[...],
                    preferred_element_type=jnp.float32)
            + b_cls_ref[...])


def square_model_lstm(x, params, *, t_chunk=64, b_tile=None):
    """x: (batch, seq, n_features) float32, batch_first like the PyTorch module."""
    w_ih, w_hh = params["w_ih"], params["w_hh"]
    b_ih, b_hh = params["b_ih"], params["b_hh"]
    w_cls, b_cls = params["w_cls"], params["b_cls"]

    f32, bf16 = jnp.float32, jnp.bfloat16
    x = x.astype(f32)
    B, S, F = x.shape
    H = w_hh.shape[1]               # w_hh is (4H, H) in PyTorch layout
    O = w_cls.shape[0]

    # Lane-aligned padded sizes for hidden / output.
    h_pad = _round_up(H, 128)
    o_pad = _round_up(O, 128)

    # Batch tile: MXU-filling (<=128 rows) but >=2 tiles when the batch allows so
    # v7x's two TensorCores both get work on the "parallel" axis.
    b_pad8 = _round_up(B, 8)
    if b_tile is None:
        b_tile = min(128, b_pad8)
        if b_pad8 == b_tile and b_pad8 >= 128:
            b_tile = b_pad8 // 2
    b_tile = max(8, _round_up(b_tile, 8))
    n_btiles = pl.cdiv(b_pad8, b_tile)
    b_all = n_btiles * b_tile

    # Time chunk: big enough to amortize per-grid-step overhead; partial unroll.
    t_chunk = max(1, min(t_chunk, S))
    s_pad = _round_up(S, t_chunk)
    n_chunks = s_pad // t_chunk
    unroll = True if t_chunk <= 16 else 8

    # Gate order i, f, g, o; each gate's H real columns sit at offset g*h_pad so gate
    # slices are 128-lane aligned.  Zero padding keeps padded lanes of h/c exactly 0
    # (i=f=o=0.5, g=0 -> c stays 0).  Weights cast to bf16 for the MXU; biases stay f32.
    wt_ih = jnp.transpose(w_ih).astype(f32)          # (F, 4H)
    wt_hh = jnp.transpose(w_hh).astype(f32)          # (H, 4H)
    bsum = (b_ih + b_hh).astype(f32)

    w_ih_p = jnp.zeros((F, 4 * h_pad), f32)          # K = F (unpadded)
    w_hh_p = jnp.zeros((h_pad, 4 * h_pad), f32)
    bias_p = jnp.zeros((1, 4 * h_pad), f32)
    for g in range(4):
        w_ih_p = w_ih_p.at[:, g * h_pad:g * h_pad + H].set(wt_ih[:, g * H:(g + 1) * H])
        w_hh_p = w_hh_p.at[:H, g * h_pad:g * h_pad + H].set(wt_hh[:, g * H:(g + 1) * H])
        bias_p = bias_p.at[0, g * h_pad:g * h_pad + H].set(bsum[g * H:(g + 1) * H])
    w_ih_b = w_ih_p.astype(bf16)
    w_hh_b = w_hh_p.astype(bf16)

    w_cls_b = jnp.zeros((h_pad, o_pad), f32).at[:H, :O].set(
        jnp.transpose(w_cls).astype(f32)).astype(bf16)
    b_cls_p = jnp.zeros((1, o_pad), f32).at[0, :O].set(b_cls.astype(f32))

    # x: one transpose to time-major + zero pad of batch/seq only (no feature pad,
    # no multi-pass reshape chain).  bf16 halves the HBM stream.
    x_tm = jnp.transpose(x, (1, 0, 2)).astype(bf16)              # (S, B, F)
    x_p = jnp.zeros((s_pad, b_all, F), bf16).at[:S, :B, :].set(x_tm)

    kernel = functools.partial(_lstm_kernel, seq_len=S, unroll=unroll)

    out = pl.pallas_call(
        kernel,
        out_shape=jax.ShapeDtypeStruct((b_all, o_pad), f32),
        grid_spec=pltpu.PrefetchScalarGridSpec(
            num_scalar_prefetch=0,
            grid=(n_btiles, n_chunks),
            in_specs=[
                pl.BlockSpec((t_chunk, b_tile, F),
                             lambda bt, tc: (tc, bt, 0)),                 # x chunk
                pl.BlockSpec((F, 4 * h_pad), lambda bt, tc: (0, 0)),      # W_ih^T (bf16)
                pl.BlockSpec((h_pad, 4 * h_pad), lambda bt, tc: (0, 0)),  # W_hh^T (bf16)
                pl.BlockSpec((1, 4 * h_pad), lambda bt, tc: (0, 0)),      # bias (f32)
                pl.BlockSpec((h_pad, o_pad), lambda bt, tc: (0, 0)),      # W_cls^T (bf16)
                pl.BlockSpec((1, o_pad), lambda bt, tc: (0, 0)),          # b_cls (f32)
            ],
            out_specs=pl.BlockSpec((b_tile, o_pad), lambda bt, tc: (bt, 0)),
            scratch_shapes=[
                pltpu.VMEM((b_tile, h_pad), f32),   # h state
                pltpu.VMEM((b_tile, h_pad), f32),   # c state
            ],
        ),
        compiler_params=pltpu.CompilerParams(
            dimension_semantics=("parallel", "arbitrary"),
            vmem_limit_bytes=32 * 1024 * 1024),
    )(x_p, w_ih_b, w_hh_b, bias_p, w_cls_b, b_cls_p)

    return out[:B, :O].reshape(-1, O)


def init_params(key, n_features, hidden_dim, n_outputs):
    """Deterministic init mimicking PyTorch defaults: U(-1/sqrt(H), 1/sqrt(H))."""
    ks = jax.random.split(key, 6)
    bound = 1.0 / jnp.sqrt(jnp.float32(hidden_dim))

    def u(k, shape):
        return jax.random.uniform(k, shape, jnp.float32, -bound, bound)

    return {
        "w_ih": u(ks[0], (4 * hidden_dim, n_features)),
        "w_hh": u(ks[1], (4 * hidden_dim, hidden_dim)),
        "b_ih": u(ks[2], (4 * hidden_dim,)),
        "b_hh": u(ks[3], (4 * hidden_dim,)),
        "w_cls": u(ks[4], (n_outputs, hidden_dim)),
        "b_cls": u(ks[5], (n_outputs,)),
    }


def _reference(x, params):
    """Pure-JAX f32 reference of the same forward pass (for sanity checking)."""
    w_ih, w_hh = params["w_ih"], params["w_hh"]
    b = params["b_ih"] + params["b_hh"]
    H = w_hh.shape[1]
    B = x.shape[0]
    h = jnp.zeros((B, H), jnp.float32)
    c = jnp.zeros((B, H), jnp.float32)

    def step(carry, x_t):
        h, c = carry
        g = x_t @ w_ih.T + h @ w_hh.T + b
        i = jax.nn.sigmoid(g[:, 0 * H:1 * H])
        f = jax.nn.sigmoid(g[:, 1 * H:2 * H])
        gg = jnp.tanh(g[:, 2 * H:3 * H])
        o = jax.nn.sigmoid(g[:, 3 * H:4 * H])
        c = f * c + i * gg
        h = o * jnp.tanh(c)
        return (h, c), None

    (h, c), _ = jax.lax.scan(step, (h, c), jnp.transpose(x, (1, 0, 2)))
    return h @ params["w_cls"].T + params["b_cls"]


if __name__ == "__main__":
    B, S, F, H, O = 2, 8, 4, 32, 1

    key = jax.random.PRNGKey(0)
    k_x, k_p = jax.random.split(key)
    x = jax.random.normal(k_x, (B, S, F), jnp.float32)
    params = init_params(k_p, F, H, O)

    out = jax.block_until_ready(square_model_lstm(x, params))
    ref = _reference(x, params)
    assert out.shape == (B, O)
    # bf16 MXU operands (f32 accumulation / f32 state) -> tolerance loosened vs f32.
    assert jnp.allclose(out, ref, atol=5e-2, rtol=5e-2), (out, ref)
    print("KERNEL_OK")
</pallas_src>

<mosaic_0001>
module attributes {stable_mosaic.version = 11 : i64} {
  func.func @_lstm_kernel(%arg0: i32, %arg1: i32, %arg2: memref<8x8x4xbf16, #tpu.memory_space<vmem>>, %arg3: memref<4x512xbf16, #tpu.memory_space<vmem>>, %arg4: memref<128x512xbf16, #tpu.memory_space<vmem>>, %arg5: memref<1x512xf32, #tpu.memory_space<vmem>>, %arg6: memref<128x128xbf16, #tpu.memory_space<vmem>>, %arg7: memref<1x128xf32, #tpu.memory_space<vmem>>, %arg8: memref<8x128xf32, #tpu.memory_space<vmem>>, %arg9: memref<8x128xf32, #tpu.memory_space<vmem>>, %arg10: memref<8x128xf32, #tpu.memory_space<vmem>>) attributes {dimension_semantics = [#tpu.dimension_semantics<parallel>, #tpu.dimension_semantics<arbitrary>], iteration_bounds = array<i64: 1, 1>, scalar_prefetch = 0 : i64, scratch_operands = 2 : i64, tpu.core_type = #tpu.core_type<tc>, window_params = [{transform_indices = @transform_0, window_bounds = array<i64: 8, 8, 4>}, {pipeline_mode = #tpu.pipeline_mode<synchronous>, transform_indices = @transform_1, window_bounds = array<i64: 4, 512>}, {pipeline_mode = #tpu.pipeline_mode<synchronous>, transform_indices = @transform_2, window_bounds = array<i64: 128, 512>}, {pipeline_mode = #tpu.pipeline_mode<synchronous>, transform_indices = @transform_3, window_bounds = array<i64: 1, 512>}, {pipeline_mode = #tpu.pipeline_mode<synchronous>, transform_indices = @transform_4, window_bounds = array<i64: 128, 128>}, {pipeline_mode = #tpu.pipeline_mode<synchronous>, transform_indices = @transform_5, window_bounds = array<i64: 1, 128>}, {transform_indices = @transform_6, window_bounds = array<i64: 8, 128>}]} {
    %c0_i32 = arith.constant 0 : i32
    %0 = arith.cmpi eq, %arg1, %c0_i32 : i32
    %1 = arith.extui %0 : i1 to i32
    %c0_i32_0 = arith.constant 0 : i32
    %2 = arith.cmpi ne, %1, %c0_i32_0 : i32
    scf.if %2 {
      %cst_72 = arith.constant 0.000000e+00 : f32
      %279 = vector.broadcast %cst_72 : f32 to vector<8x128xf32>
      %c0_73 = arith.constant 0 : index
      %c0_74 = arith.constant 0 : index
      %280 = vector.load %arg9[%c0_73, %c0_74] : memref<8x128xf32, #tpu.memory_space<vmem>>, vector<8x128xf32>
      tpu.vector_store %arg9[%c0_73, %c0_74], %279 {strides = array<i32>} : memref<8x128xf32, #tpu.memory_space<vmem>>, vector<8x128xf32>,
      %cst_75 = arith.constant 0.000000e+00 : f32
      %281 = vector.broadcast %cst_75 : f32 to vector<8x128xf32>
      %c0_76 = arith.constant 0 : index
      %c0_77 = arith.constant 0 : index
      %282 = vector.load %arg10[%c0_76, %c0_77] : memref<8x128xf32, #tpu.memory_space<vmem>>, vector<8x128xf32>
      tpu.vector_store %arg10[%c0_76, %c0_77], %281 {strides = array<i32>} : memref<8x128xf32, #tpu.memory_space<vmem>>, vector<8x128xf32>,
    } else {
    }
    %c0 = arith.constant 0 : index
    %c0_1 = arith.constant 0 : index
    %3 = vector.load %arg3[%c0, %c0_1] : memref<4x512xbf16, #tpu.memory_space<vmem>>, vector<4x512xbf16>
    %c0_2 = arith.constant 0 : index
    %c0_3 = arith.constant 0 : index
    %4 = vector.load %arg4[%c0_2, %c0_3] : memref<128x512xbf16, #tpu.memory_space<vmem>>, vector<128x512xbf16>
    %c0_4 = arith.constant 0 : index
    %c0_5 = arith.constant 0 : index
    %5 = vector.load %arg5[%c0_4, %c0_5] : memref<1x512xf32, #tpu.memory_space<vmem>>, vector<1x512xf32>
    %6 = vector.shape_cast %5 : vector<1x512xf32> to vector<1x512xf32>
    %7 = vector.broadcast %6 : vector<1x512xf32> to vector<8x512xf32>
    %c0_6 = arith.constant 0 : index
    %c0_7 = arith.constant 0 : index
    %8 = vector.load %arg9[%c0_6, %c0_7] : memref<8x128xf32, #tpu.memory_space<vmem>>, vector<8x128xf32>
    %c0_8 = arith.constant 0 : index
    %c0_9 = arith.constant 0 : index
    %9 = vector.load %arg10[%c0_8, %c0_9] : memref<8x128xf32, #tpu.memory_space<vmem>>, vector<8x128xf32>
    %c0_i32_10 = arith.constant 0 : i32
    %10 = arith.index_cast %c0_i32_10 : i32 to index
    %c0_11 = arith.constant 0 : index
    %c0_12 = arith.constant 0 : index
    %11 = vector.load %arg2[%10, %c0_11, %c0_12] : memref<8x8x4xbf16, #tpu.memory_space<vmem>>, vector<1x8x4xbf16>
    %12 = vector.shape_cast %11 : vector<1x8x4xbf16> to vector<8x4xbf16>
    %cst = arith.constant dense<0.000000e+00> : vector<8x512xf32>
    %13 = tpu.matmul %12, %3, %cst {dimension_numbers = #tpu.dot_dimension_numbers<[1], [0], [0], [1], [0, 0, 1, 1], [], []>} : vector<8x4xbf16>, vector<4x512xbf16>, vector<8x512xf32> -> vector<8x512xf32>
    %14 = arith.truncf %8 : vector<8x128xf32> to vector<8x128xbf16>
    %cst_13 = arith.constant dense<0.000000e+00> : vector<8x512xf32>
    %15 = tpu.matmul %14, %4, %cst_13 {dimension_numbers = #tpu.dot_dimension_numbers<[1], [0], [0], [1], [0, 0, 1, 1], [], []>} : vector<8x128xbf16>, vector<128x512xbf16>, vector<8x512xf32> -> vector<8x512xf32>
    %16 = arith.addf %13, %15 : vector<8x512xf32>
    %17 = arith.addf %16, %7 : vector<8x512xf32>
    %18 = vector.extract_strided_slice %17 {offsets = [0, 0], sizes = [8, 128], strides = [1, 1]} : vector<8x512xf32> to vector<8x128xf32>
    %19 = arith.negf %18 : vector<8x128xf32>
    %20 = math.exp %19 : vector<8x128xf32>
    %cst_14 = arith.constant 1.000000e+00 : f32
    %21 = vector.broadcast %cst_14 : f32 to vector<8x128xf32>
    %22 = arith.addf %21, %20 : vector<8x128xf32>
    %23 = arith.divf %21, %22 : vector<8x128xf32>
    %24 = vector.extract_strided_slice %17 {offsets = [0, 128], sizes = [8, 128], strides = [1, 1]} : vector<8x512xf32> to vector<8x128xf32>
    %25 = arith.negf %24 : vector<8x128xf32>
    %26 = math.exp %25 : vector<8x128xf32>
    %cst_15 = arith.constant 1.000000e+00 : f32
    %27 = vector.broadcast %cst_15 : f32 to vector<8x128xf32>
    %28 = arith.addf %27, %26 : vector<8x128xf32>
    %29 = arith.divf %27, %28 : vector<8x128xf32>
    %30 = vector.extract_strided_slice %17 {offsets = [0, 256], sizes = [8, 128], strides = [1, 1]} : vector<8x512xf32> to vector<8x128xf32>
    %31 = math.tanh %30 : vector<8x128xf32>
    %32 = vector.extract_strided_slice %17 {offsets = [0, 384], sizes = [8, 128], strides = [1, 1]} : vector<8x512xf32> to vector<8x128xf32>
    %33 = arith.negf %32 : vector<8x128xf32>
    %34 = math.exp %33 : vector<8x128xf32>
    %cst_16 = arith.constant 1.000000e+00 : f32
    %35 = vector.broadcast %cst_16 : f32 to vector<8x128xf32>
    %36 = arith.addf %35, %34 : vector<8x128xf32>
    %37 = arith.divf %35, %36 : vector<8x128xf32>
    %38 = arith.mulf %29, %9 : vector<8x128xf32>
    %39 = arith.mulf %23, %31 : vector<8x128xf32>
    %40 = arith.addf %38, %39 : vector<8x128xf32>
    %41 = math.tanh %40 : vector<8x128xf32>
    %42 = arith.mulf %37, %41 : vector<8x128xf32>
    %c1_i32 = arith.constant 1 : i32
    %43 = arith.index_cast %c1_i32 : i32 to index
    %c0_17 = arith.constant 0 : index
    %c0_18 = arith.constant 0 : index
    %44 = vector.load %arg2[%43, %c0_17, %c0_18] : memref<8x8x4xbf16, #tpu.memory_space<vmem>>, vector<1x8x4xbf16>
    %45 = vector.shape_cast %44 : vector<1x8x4xbf16> to vector<8x4xbf16>
    %cst_19 = arith.constant dense<0.000000e+00> : vector<8x512xf32>
    %46 = tpu.matmul %45, %3, %cst_19 {dimension_numbers = #tpu.dot_dimension_numbers<[1], [0], [0], [1], [0, 0, 1, 1], [], []>} : vector<8x4xbf16>, vector<4x512xbf16>, vector<8x512xf32> -> vector<8x512xf32>
    %47 = arith.truncf %42 : vector<8x128xf32> to vector<8x128xbf16>
    %cst_20 = arith.constant dense<0.000000e+00> : vector<8x512xf32>
    %48 = tpu.matmul %47, %4, %cst_20 {dimension_numbers = #tpu.dot_dimension_numbers<[1], [0], [0], [1], [0, 0, 1, 1], [], []>} : vector<8x128xbf16>, vector<128x512xbf16>, vector<8x512xf32> -> vector<8x512xf32>
    %49 = arith.addf %46, %48 : vector<8x512xf32>
    %50 = arith.addf %49, %7 : vector<8x512xf32>
    %51 = vector.extract_strided_slice %50 {offsets = [0, 0], sizes = [8, 128], strides = [1, 1]} : vector<8x512xf32> to vector<8x128xf32>
    %52 = arith.negf %51 : vector<8x128xf32>
    %53 = math.exp %52 : vector<8x128xf32>
    %cst_21 = arith.constant 1.000000e+00 : f32
    %54 = vector.broadcast %cst_21 : f32 to vector<8x128xf32>
    %55 = arith.addf %54, %53 : vector<8x128xf32>
    %56 = arith.divf %54, %55 : vector<8x128xf32>
    %57 = vector.extract_strided_slice %50 {offsets = [0, 128], sizes = [8, 128], strides = [1, 1]} : vector<8x512xf32> to vector<8x128xf32>
    %58 = arith.negf %57 : vector<8x128xf32>
    %59 = math.exp %58 : vector<8x128xf32>
    %cst_22 = arith.constant 1.000000e+00 : f32
    %60 = vector.broadcast %cst_22 : f32 to vector<8x128xf32>
    %61 = arith.addf %60, %59 : vector<8x128xf32>
    %62 = arith.divf %60, %61 : vector<8x128xf32>
    %63 = vector.extract_strided_slice %50 {offsets = [0, 256], sizes = [8, 128], strides = [1, 1]} : vector<8x512xf32> to vector<8x128xf32>
    %64 = math.tanh %63 : vector<8x128xf32>
    %65 = vector.extract_strided_slice %50 {offsets = [0, 384], sizes = [8, 128], strides = [1, 1]} : vector<8x512xf32> to vector<8x128xf32>
    %66 = arith.negf %65 : vector<8x128xf32>
    %67 = math.exp %66 : vector<8x128xf32>
    %cst_23 = arith.constant 1.000000e+00 : f32
    %68 = vector.broadcast %cst_23 : f32 to vector<8x128xf32>
    %69 = arith.addf %68, %67 : vector<8x128xf32>
    %70 = arith.divf %68, %69 : vector<8x128xf32>
    %71 = arith.mulf %62, %40 : vector<8x128xf32>
    %72 = arith.mulf %56, %64 : vector<8x128xf32>
    %73 = arith.addf %71, %72 : vector<8x128xf32>
    %74 = math.tanh %73 : vector<8x128xf32>
    %75 = arith.mulf %70, %74 : vector<8x128xf32>
    %c2_i32 = arith.constant 2 : i32
    %76 = arith.index_cast %c2_i32 : i32 to index
    %c0_24 = arith.constant 0 : index
    %c0_25 = arith.constant 0 : index
    %77 = vector.load %arg2[%76, %c0_24, %c0_25] : memref<8x8x4xbf16, #tpu.memory_space<vmem>>, vector<1x8x4xbf16>
    %78 = vector.shape_cast %77 : vector<1x8x4xbf16> to vector<8x4xbf16>
    %cst_26 = arith.constant dense<0.000000e+00> : vector<8x512xf32>
    %79 = tpu.matmul %78, %3, %cst_26 {dimension_numbers = #tpu.dot_dimension_numbers<[1], [0], [0], [1], [0, 0, 1, 1], [], []>} : vector<8x4xbf16>, vector<4x512xbf16>, vector<8x512xf32> -> vector<8x512xf32>
    %80 = arith.truncf %75 : vector<8x128xf32> to vector<8x128xbf16>
    %cst_27 = arith.constant dense<0.000000e+00> : vector<8x512xf32>
    %81 = tpu.matmul %80, %4, %cst_27 {dimension_numbers = #tpu.dot_dimension_numbers<[1], [0], [0], [1], [0, 0, 1, 1], [], []>} : vector<8x128xbf16>, vector<128x512xbf16>, vector<8x512xf32> -> vector<8x512xf32>
    %82 = arith.addf %79, %81 : vector<8x512xf32>
    %83 = arith.addf %82, %7 : vector<8x512xf32>
    %84 = vector.extract_strided_slice %83 {offsets = [0, 0], sizes = [8, 128], strides = [1, 1]} : vector<8x512xf32> to vector<8x128xf32>
    %85 = arith.negf %84 : vector<8x128xf32>
    %86 = math.exp %85 : vector<8x128xf32>
    %cst_28 = arith.constant 1.000000e+00 : f32
    %87 = vector.broadcast %cst_28 : f32 to vector<8x128xf32>
    %88 = arith.addf %87, %86 : vector<8x128xf32>
    %89 = arith.divf %87, %88 : vector<8x128xf32>
    %90 = vector.extract_strided_slice %83 {offsets = [0, 128], sizes = [8, 128], strides = [1, 1]} : vector<8x512xf32> to vector<8x128xf32>
    %91 = arith.negf %90 : vector<8x128xf32>
    %92 = math.exp %91 : vector<8x128xf32>
    %cst_29 = arith.constant 1.000000e+00 : f32
    %93 = vector.broadcast %cst_29 : f32 to vector<8x128xf32>
    %94 = arith.addf %93, %92 : vector<8x128xf32>
    %95 = arith.divf %93, %94 : vector<8x128xf32>
    %96 = vector.extract_strided_slice %83 {offsets = [0, 256], sizes = [8, 128], strides = [1, 1]} : vector<8x512xf32> to vector<8x128xf32>
    %97 = math.tanh %96 : vector<8x128xf32>
    %98 = vector.extract_strided_slice %83 {offsets = [0, 384], sizes = [8, 128], strides = [1, 1]} : vector<8x512xf32> to vector<8x128xf32>
    %99 = arith.negf %98 : vector<8x128xf32>
    %100 = math.exp %99 : vector<8x128xf32>
    %cst_30 = arith.constant 1.000000e+00 : f32
    %101 = vector.broadcast %cst_30 : f32 to vector<8x128xf32>
    %102 = arith.addf %101, %100 : vector<8x128xf32>
    %103 = arith.divf %101, %102 : vector<8x128xf32>
    %104 = arith.mulf %95, %73 : vector<8x128xf32>
    %105 = arith.mulf %89, %97 : vector<8x128xf32>
    %106 = arith.addf %104, %105 : vector<8x128xf32>
    %107 = math.tanh %106 : vector<8x128xf32>
    %108 = arith.mulf %103, %107 : vector<8x128xf32>
    %c3_i32 = arith.constant 3 : i32
    %109 = arith.index_cast %c3_i32 : i32 to index
    %c0_31 = arith.constant 0 : index
    %c0_32 = arith.constant 0 : index
    %110 = vector.load %arg2[%109, %c0_31, %c0_32] : memref<8x8x4xbf16, #tpu.memory_space<vmem>>, vector<1x8x4xbf16>
    %111 = vector.shape_cast %110 : vector<1x8x4xbf16> to vector<8x4xbf16>
    %cst_33 = arith.constant dense<0.000000e+00> : vector<8x512xf32>
    %112 = tpu.matmul %111, %3, %cst_33 {dimension_numbers = #tpu.dot_dimension_numbers<[1], [0], [0], [1], [0, 0, 1, 1], [], []>} : vector<8x4xbf16>, vector<4x512xbf16>, vector<8x512xf32> -> vector<8x512xf32>
    %113 = arith.truncf %108 : vector<8x128xf32> to vector<8x128xbf16>
    %cst_34 = arith.constant dense<0.000000e+00> : vector<8x512xf32>
    %114 = tpu.matmul %113, %4, %cst_34 {dimension_numbers = #tpu.dot_dimension_numbers<[1], [0], [0], [1], [0, 0, 1, 1], [], []>} : vector<8x128xbf16>, vector<128x512xbf16>, vector<8x512xf32> -> vector<8x512xf32>
    %115 = arith.addf %112, %114 : vector<8x512xf32>
    %116 = arith.addf %115, %7 : vector<8x512xf32>
    %117 = vector.extract_strided_slice %116 {offsets = [0, 0], sizes = [8, 128], strides = [1, 1]} : vector<8x512xf32> to vector<8x128xf32>
    %118 = arith.negf %117 : vector<8x128xf32>
    %119 = math.exp %118 : vector<8x128xf32>
    %cst_35 = arith.constant 1.000000e+00 : f32
    %120 = vector.broadcast %cst_35 : f32 to vector<8x128xf32>
    %121 = arith.addf %120, %119 : vector<8x128xf32>
    %122 = arith.divf %120, %121 : vector<8x128xf32>
    %123 = vector.extract_strided_slice %116 {offsets = [0, 128], sizes = [8, 128], strides = [1, 1]} : vector<8x512xf32> to vector<8x128xf32>
    %124 = arith.negf %123 : vector<8x128xf32>
    %125 = math.exp %124 : vector<8x128xf32>
    %cst_36 = arith.constant 1.000000e+00 : f32
    %126 = vector.broadcast %cst_36 : f32 to vector<8x128xf32>
    %127 = arith.addf %126, %125 : vector<8x128xf32>
    %128 = arith.divf %126, %127 : vector<8x128xf32>
    %129 = vector.extract_strided_slice %116 {offsets = [0, 256], sizes = [8, 128], strides = [1, 1]} : vector<8x512xf32> to vector<8x128xf32>
    %130 = math.tanh %129 : vector<8x128xf32>
    %131 = vector.extract_strided_slice %116 {offsets = [0, 384], sizes = [8, 128], strides = [1, 1]} : vector<8x512xf32> to vector<8x128xf32>
    %132 = arith.negf %131 : vector<8x128xf32>
    %133 = math.exp %132 : vector<8x128xf32>
    %cst_37 = arith.constant 1.000000e+00 : f32
    %134 = vector.broadcast %cst_37 : f32 to vector<8x128xf32>
    %135 = arith.addf %134, %133 : vector<8x128xf32>
    %136 = arith.divf %134, %135 : vector<8x128xf32>
    %137 = arith.mulf %128, %106 : vector<8x128xf32>
    %138 = arith.mulf %122, %130 : vector<8x128xf32>
    %139 = arith.addf %137, %138 : vector<8x128xf32>
    %140 = math.tanh %139 : vector<8x128xf32>
    %141 = arith.mulf %136, %140 : vector<8x128xf32>
    %c4_i32 = arith.constant 4 : i32
    %142 = arith.index_cast %c4_i32 : i32 to index
    %c0_38 = arith.constant 0 : index
    %c0_39 = arith.constant 0 : index
    %143 = vector.load %arg2[%142, %c0_38, %c0_39] : memref<8x8x4xbf16, #tpu.memory_space<vmem>>, vector<1x8x4xbf16>
    %144 = vector.shape_cast %143 : vector<1x8x4xbf16> to vector<8x4xbf16>
    %cst_40 = arith.constant dense<0.000000e+00> : vector<8x512xf32>
    %145 = tpu.matmul %144, %3, %cst_40 {dimension_numbers = #tpu.dot_dimension_numbers<[1], [0], [0], [1], [0, 0, 1, 1], [], []>} : vector<8x4xbf16>, vector<4x512xbf16>, vector<8x512xf32> -> vector<8x512xf32>
    %146 = arith.truncf %141 : vector<8x128xf32> to vector<8x128xbf16>
    %cst_41 = arith.constant dense<0.000000e+00> : vector<8x512xf32>
    %147 = tpu.matmul %146, %4, %cst_41 {dimension_numbers = #tpu.dot_dimension_numbers<[1], [0], [0], [1], [0, 0, 1, 1], [], []>} : vector<8x128xbf16>, vector<128x512xbf16>, vector<8x512xf32> -> vector<8x512xf32>
    %148 = arith.addf %145, %147 : vector<8x512xf32>
    %149 = arith.addf %148, %7 : vector<8x512xf32>
    %150 = vector.extract_strided_slice %149 {offsets = [0, 0], sizes = [8, 128], strides = [1, 1]} : vector<8x512xf32> to vector<8x128xf32>
    %151 = arith.negf %150 : vector<8x128xf32>
    %152 = math.exp %151 : vector<8x128xf32>
    %cst_42 = arith.constant 1.000000e+00 : f32
    %153 = vector.broadcast %cst_42 : f32 to vector<8x128xf32>
    %154 = arith.addf %153, %152 : vector<8x128xf32>
    %155 = arith.divf %153, %154 : vector<8x128xf32>
    %156 = vector.extract_strided_slice %149 {offsets = [0, 128], sizes = [8, 128], strides = [1, 1]} : vector<8x512xf32> to vector<8x128xf32>
    %157 = arith.negf %156 : vector<8x128xf32>
    %158 = math.exp %157 : vector<8x128xf32>
    %cst_43 = arith.constant 1.000000e+00 : f32
    %159 = vector.broadcast %cst_43 : f32 to vector<8x128xf32>
    %160 = arith.addf %159, %158 : vector<8x128xf32>
    %161 = arith.divf %159, %160 : vector<8x128xf32>
    %162 = vector.extract_strided_slice %149 {offsets = [0, 256], sizes = [8, 128], strides = [1, 1]} : vector<8x512xf32> to vector<8x128xf32>
    %163 = math.tanh %162 : vector<8x128xf32>
    %164 = vector.extract_strided_slice %149 {offsets = [0, 384], sizes = [8, 128], strides = [1, 1]} : vector<8x512xf32> to vector<8x128xf32>
    %165 = arith.negf %164 : vector<8x128xf32>
    %166 = math.exp %165 : vector<8x128xf32>
    %cst_44 = arith.constant 1.000000e+00 : f32
    %167 = vector.broadcast %cst_44 : f32 to vector<8x128xf32>
    %168 = arith.addf %167, %166 : vector<8x128xf32>
    %169 = arith.divf %167, %168 : vector<8x128xf32>
    %170 = arith.mulf %161, %139 : vector<8x128xf32>
    %171 = arith.mulf %155, %163 : vector<8x128xf32>
    %172 = arith.addf %170, %171 : vector<8x128xf32>
    %173 = math.tanh %172 : vector<8x128xf32>
    %174 = arith.mulf %169, %173 : vector<8x128xf32>
    %c5_i32 = arith.constant 5 : i32
    %175 = arith.index_cast %c5_i32 : i32 to index
    %c0_45 = arith.constant 0 : index
    %c0_46 = arith.constant 0 : index
    %176 = vector.load %arg2[%175, %c0_45, %c0_46] : memref<8x8x4xbf16, #tpu.memory_space<vmem>>, vector<1x8x4xbf16>
    %177 = vector.shape_cast %176 : vector<1x8x4xbf16> to vector<8x4xbf16>
    %cst_47 = arith.constant dense<0.000000e+00> : vector<8x512xf32>
    %178 = tpu.matmul %177, %3, %cst_47 {dimension_numbers = #tpu.dot_dimension_numbers<[1], [0], [0], [1], [0, 0, 1, 1], [], []>} : vector<8x4xbf16>, vector<4x512xbf16>, vector<8x512xf32> -> vector<8x512xf32>
    %179 = arith.truncf %174 : vector<8x128xf32> to vector<8x128xbf16>
    %cst_48 = arith.constant dense<0.000000e+00> : vector<8x512xf32>
    %180 = tpu.matmul %179, %4, %cst_48 {dimension_numbers = #tpu.dot_dimension_numbers<[1], [0], [0], [1], [0, 0, 1, 1], [], []>} : vector<8x128xbf16>, vector<128x512xbf16>, vector<8x512xf32> -> vector<8x512xf32>
    %181 = arith.addf %178, %180 : vector<8x512xf32>
    %182 = arith.addf %181, %7 : vector<8x512xf32>
    %183 = vector.extract_strided_slice %182 {offsets = [0, 0], sizes = [8, 128], strides = [1, 1]} : vector<8x512xf32> to vector<8x128xf32>
    %184 = arith.negf %183 : vector<8x128xf32>
    %185 = math.exp %184 : vector<8x128xf32>
    %cst_49 = arith.constant 1.000000e+00 : f32
    %186 = vector.broadcast %cst_49 : f32 to vector<8x128xf32>
    %187 = arith.addf %186, %185 : vector<8x128xf32>
    %188 = arith.divf %186, %187 : vector<8x128xf32>
    %189 = vector.extract_strided_slice %182 {offsets = [0, 128], sizes = [8, 128], strides = [1, 1]} : vector<8x512xf32> to vector<8x128xf32>
    %190 = arith.negf %189 : vector<8x128xf32>
    %191 = math.exp %190 : vector<8x128xf32>
    %cst_50 = arith.constant 1.000000e+00 : f32
    %192 = vector.broadcast %cst_50 : f32 to vector<8x128xf32>
    %193 = arith.addf %192, %191 : vector<8x128xf32>
    %194 = arith.divf %192, %193 : vector<8x128xf32>
    %195 = vector.extract_strided_slice %182 {offsets = [0, 256], sizes = [8, 128], strides = [1, 1]} : vector<8x512xf32> to vector<8x128xf32>
    %196 = math.tanh %195 : vector<8x128xf32>
    %197 = vector.extract_strided_slice %182 {offsets = [0, 384], sizes = [8, 128], strides = [1, 1]} : vector<8x512xf32> to vector<8x128xf32>
    %198 = arith.negf %197 : vector<8x128xf32>
    %199 = math.exp %198 : vector<8x128xf32>
    %cst_51 = arith.constant 1.000000e+00 : f32
    %200 = vector.broadcast %cst_51 : f32 to vector<8x128xf32>
    %201 = arith.addf %200, %199 : vector<8x128xf32>
    %202 = arith.divf %200, %201 : vector<8x128xf32>
    %203 = arith.mulf %194, %172 : vector<8x128xf32>
    %204 = arith.mulf %188, %196 : vector<8x128xf32>
    %205 = arith.addf %203, %204 : vector<8x128xf32>
    %206 = math.tanh %205 : vector<8x128xf32>
    %207 = arith.mulf %202, %206 : vector<8x128xf32>
    %c6_i32 = arith.constant 6 : i32
    %208 = arith.index_cast %c6_i32 : i32 to index
    %c0_52 = arith.constant 0 : index
    %c0_53 = arith.constant 0 : index
    %209 = vector.load %arg2[%208, %c0_52, %c0_53] : memref<8x8x4xbf16, #tpu.memory_space<vmem>>, vector<1x8x4xbf16>
    %210 = vector.shape_cast %209 : vector<1x8x4xbf16> to vector<8x4xbf16>
    %cst_54 = arith.constant dense<0.000000e+00> : vector<8x512xf32>
    %211 = tpu.matmul %210, %3, %cst_54 {dimension_numbers = #tpu.dot_dimension_numbers<[1], [0], [0], [1], [0, 0, 1, 1], [], []>} : vector<8x4xbf16>, vector<4x512xbf16>, vector<8x512xf32> -> vector<8x512xf32>
    %212 = arith.truncf %207 : vector<8x128xf32> to vector<8x128xbf16>
    %cst_55 = arith.constant dense<0.000000e+00> : vector<8x512xf32>
    %213 = tpu.matmul %212, %4, %cst_55 {dimension_numbers = #tpu.dot_dimension_numbers<[1], [0], [0], [1], [0, 0, 1, 1], [], []>} : vector<8x128xbf16>, vector<128x512xbf16>, vector<8x512xf32> -> vector<8x512xf32>
    %214 = arith.addf %211, %213 : vector<8x512xf32>
    %215 = arith.addf %214, %7 : vector<8x512xf32>
    %216 = vector.extract_strided_slice %215 {offsets = [0, 0], sizes = [8, 128], strides = [1, 1]} : vector<8x512xf32> to vector<8x128xf32>
    %217 = arith.negf %216 : vector<8x128xf32>
    %218 = math.exp %217 : vector<8x128xf32>
    %cst_56 = arith.constant 1.000000e+00 : f32
    %219 = vector.broadcast %cst_56 : f32 to vector<8x128xf32>
    %220 = arith.addf %219, %218 : vector<8x128xf32>
    %221 = arith.divf %219, %220 : vector<8x128xf32>
    %222 = vector.extract_strided_slice %215 {offsets = [0, 128], sizes = [8, 128], strides = [1, 1]} : vector<8x512xf32> to vector<8x128xf32>
    %223 = arith.negf %222 : vector<8x128xf32>
    %224 = math.exp %223 : vector<8x128xf32>
    %cst_57 = arith.constant 1.000000e+00 : f32
    %225 = vector.broadcast %cst_57 : f32 to vector<8x128xf32>
    %226 = arith.addf %225, %224 : vector<8x128xf32>
    %227 = arith.divf %225, %226 : vector<8x128xf32>
    %228 = vector.extract_strided_slice %215 {offsets = [0, 256], sizes = [8, 128], strides = [1, 1]} : vector<8x512xf32> to vector<8x128xf32>
    %229 = math.tanh %228 : vector<8x128xf32>
    %230 = vector.extract_strided_slice %215 {offsets = [0, 384], sizes = [8, 128], strides = [1, 1]} : vector<8x512xf32> to vector<8x128xf32>
    %231 = arith.negf %230 : vector<8x128xf32>
    %232 = math.exp %231 : vector<8x128xf32>
    %cst_58 = arith.constant 1.000000e+00 : f32
    %233 = vector.broadcast %cst_58 : f32 to vector<8x128xf32>
    %234 = arith.addf %233, %232 : vector<8x128xf32>
    %235 = arith.divf %233, %234 : vector<8x128xf32>
    %236 = arith.mulf %227, %205 : vector<8x128xf32>
    %237 = arith.mulf %221, %229 : vector<8x128xf32>
    %238 = arith.addf %236, %237 : vector<8x128xf32>
    %239 = math.tanh %238 : vector<8x128xf32>
    %240 = arith.mulf %235, %239 : vector<8x128xf32>
    %c7_i32 = arith.constant 7 : i32
    %241 = arith.index_cast %c7_i32 : i32 to index
    %c0_59 = arith.constant 0 : index
    %c0_60 = arith.constant 0 : index
    %242 = vector.load %arg2[%241, %c0_59, %c0_60] : memref<8x8x4xbf16, #tpu.memory_space<vmem>>, vector<1x8x4xbf16>
    %243 = vector.shape_cast %242 : vector<1x8x4xbf16> to vector<8x4xbf16>
    %cst_61 = arith.constant dense<0.000000e+00> : vector<8x512xf32>
    %244 = tpu.matmul %243, %3, %cst_61 {dimension_numbers = #tpu.dot_dimension_numbers<[1], [0], [0], [1], [0, 0, 1, 1], [], []>} : vector<8x4xbf16>, vector<4x512xbf16>, vector<8x512xf32> -> vector<8x512xf32>
    %245 = arith.truncf %240 : vector<8x128xf32> to vector<8x128xbf16>
    %cst_62 = arith.constant dense<0.000000e+00> : vector<8x512xf32>
    %246 = tpu.matmul %245, %4, %cst_62 {dimension_numbers = #tpu.dot_dimension_numbers<[1], [0], [0], [1], [0, 0, 1, 1], [], []>} : vector<8x128xbf16>, vector<128x512xbf16>, vector<8x512xf32> -> vector<8x512xf32>
    %247 = arith.addf %244, %246 : vector<8x512xf32>
    %248 = arith.addf %247, %7 : vector<8x512xf32>
    %249 = vector.extract_strided_slice %248 {offsets = [0, 0], sizes = [8, 128], strides = [1, 1]} : vector<8x512xf32> to vector<8x128xf32>
    %250 = arith.negf %249 : vector<8x128xf32>
    %251 = math.exp %250 : vector<8x128xf32>
    %cst_63 = arith.constant 1.000000e+00 : f32
    %252 = vector.broadcast %cst_63 : f32 to vector<8x128xf32>
    %253 = arith.addf %252, %251 : vector<8x128xf32>
    %254 = arith.divf %252, %253 : vector<8x128xf32>
    %255 = vector.extract_strided_slice %248 {offsets = [0, 128], sizes = [8, 128], strides = [1, 1]} : vector<8x512xf32> to vector<8x128xf32>
    %256 = arith.negf %255 : vector<8x128xf32>
    %257 = math.exp %256 : vector<8x128xf32>
    %cst_64 = arith.constant 1.000000e+00 : f32
    %258 = vector.broadcast %cst_64 : f32 to vector<8x128xf32>
    %259 = arith.addf %258, %257 : vector<8x128xf32>
    %260 = arith.divf %258, %259 : vector<8x128xf32>
    %261 = vector.extract_strided_slice %248 {offsets = [0, 256], sizes = [8, 128], strides = [1, 1]} : vector<8x512xf32> to vector<8x128xf32>
    %262 = math.tanh %261 : vector<8x128xf32>
    %263 = vector.extract_strided_slice %248 {offsets = [0, 384], sizes = [8, 128], strides = [1, 1]} : vector<8x512xf32> to vector<8x128xf32>
    %264 = arith.negf %263 : vector<8x128xf32>
    %265 = math.exp %264 : vector<8x128xf32>
    %cst_65 = arith.constant 1.000000e+00 : f32
    %266 = vector.broadcast %cst_65 : f32 to vector<8x128xf32>
    %267 = arith.addf %266, %265 : vector<8x128xf32>
    %268 = arith.divf %266, %267 : vector<8x128xf32>
    %269 = arith.mulf %260, %238 : vector<8x128xf32>
    %270 = arith.mulf %254, %262 : vector<8x128xf32>
    %271 = arith.addf %269, %270 : vector<8x128xf32>
    %272 = math.tanh %271 : vector<8x128xf32>
    %273 = arith.mulf %268, %272 : vector<8x128xf32>
    %c8_i32 = arith.constant 8 : i32
    %c0_66 = arith.constant 0 : index
    %c0_67 = arith.constant 0 : index
    %274 = vector.load %arg9[%c0_66, %c0_67] : memref<8x128xf32, #tpu.memory_space<vmem>>, vector<8x128xf32>
    tpu.vector_store %arg9[%c0_66, %c0_67], %273 {strides = array<i32>} : memref<8x128xf32, #tpu.memory_space<vmem>>, vector<8x128xf32>,
    %c0_68 = arith.constant 0 : index
    %c0_69 = arith.constant 0 : index
    %275 = vector.load %arg10[%c0_68, %c0_69] : memref<8x128xf32, #tpu.memory_space<vmem>>, vector<8x128xf32>
    tpu.vector_store %arg10[%c0_68, %c0_69], %271 {strides = array<i32>} : memref<8x128xf32, #tpu.memory_space<vmem>>, vector<8x128xf32>,
    %c0_i32_70 = arith.constant 0 : i32
    %276 = arith.cmpi eq, %arg1, %c0_i32_70 : i32
    %277 = arith.extui %276 : i1 to i32
    %c0_i32_71 = arith.constant 0 : i32
    %278 = arith.cmpi ne, %277, %c0_i32_71 : i32
    scf.if %278 {
      %279 = arith.truncf %273 : vector<8x128xf32> to vector<8x128xbf16>
      %c0_72 = arith.constant 0 : index
      %c0_73 = arith.constant 0 : index
      %280 = vector.load %arg6[%c0_72, %c0_73] : memref<128x128xbf16, #tpu.memory_space<vmem>>, vector<128x128xbf16>
      %cst_74 = arith.constant dense<0.000000e+00> : vector<8x128xf32>
      %281 = tpu.matmul %279, %280, %cst_74 {dimension_numbers = #tpu.dot_dimension_numbers<[1], [0], [0], [1], [0, 0, 1, 1], [], []>} : vector<8x128xbf16>, vector<128x128xbf16>, vector<8x128xf32> -> vector<8x128xf32>
      %c0_75 = arith.constant 0 : index
      %c0_76 = arith.constant 0 : index
      %282 = vector.load %arg7[%c0_75, %c0_76] : memref<1x128xf32, #tpu.memory_space<vmem>>, vector<1x128xf32>
      %283 = vector.broadcast %282 : vector<1x128xf32> to vector<8x128xf32>
      %284 = arith.addf %281, %283 : vector<8x128xf32>
      %c0_77 = arith.constant 0 : index
      %c0_78 = arith.constant 0 : index
      %285 = vector.load %arg8[%c0_77, %c0_78] : memref<8x128xf32, #tpu.memory_space<vmem>>, vector<8x128xf32>
      tpu.vector_store %arg8[%c0_77, %c0_78], %284 {strides = array<i32>} : memref<8x128xf32, #tpu.memory_space<vmem>>, vector<8x128xf32>,
    } else {
    }
    return
  }
  func.func @transform_0(%arg0: i32, %arg1: i32) -> (i32, i32, i32) {
    %c0_i32 = arith.constant 0 : i32
    %c0_i32_0 = arith.constant 0 : i32
    return %arg1, %arg0, %c0_i32 : i32, i32, i32
  }
  func.func @transform_1(%arg0: i32, %arg1: i32) -> (i32, i32) {
    %c0_i32 = arith.constant 0 : i32
    %c0_i32_0 = arith.constant 0 : i32
    %c0_i32_1 = arith.constant 0 : i32
    return %c0_i32, %c0_i32_0 : i32, i32
  }
  func.func @transform_2(%arg0: i32, %arg1: i32) -> (i32, i32) {
    %c0_i32 = arith.constant 0 : i32
    %c0_i32_0 = arith.constant 0 : i32
    %c0_i32_1 = arith.constant 0 : i32
    return %c0_i32, %c0_i32_0 : i32, i32
  }
  func.func @transform_3(%arg0: i32, %arg1: i32) -> (i32, i32) {
    %c0_i32 = arith.constant 0 : i32
    %c0_i32_0 = arith.constant 0 : i32
    %c0_i32_1 = arith.constant 0 : i32
    return %c0_i32, %c0_i32_0 : i32, i32
  }
  func.func @transform_4(%arg0: i32, %arg1: i32) -> (i32, i32) {
    %c0_i32 = arith.constant 0 : i32
    %c0_i32_0 = arith.constant 0 : i32
    %c0_i32_1 = arith.constant 0 : i32
    return %c0_i32, %c0_i32_0 : i32, i32
  }
  func.func @transform_5(%arg0: i32, %arg1: i32) -> (i32, i32) {
    %c0_i32 = arith.constant 0 : i32
    %c0_i32_0 = arith.constant 0 : i32
    %c0_i32_1 = arith.constant 0 : i32
    return %c0_i32, %c0_i32_0 : i32, i32
  }
  func.func @transform_6(%arg0: i32, %arg1: i32) -> (i32, i32) {
    %c0_i32 = arith.constant 0 : i32
    %c0_i32_0 = arith.constant 0 : i32
    return %arg0, %c0_i32 : i32, i32
  }
}

</mosaic_0001>

<llo_original>
// kernel: tpu_custom_call.1
$region0: #{tpu_custom_call.1}
  #allocation0 [shape = 'u32[]', space=smem, size = 0x4, offset = 0x4, fixed_abs, tag = 'smem constant byte address 0x4 - core index']
  #allocation1 [shape = 'u32[144,128]{1,0:T(1,128)}', space=vmem, size = 0x12000, scoped, tag = 'internal scratch']
  #allocation2 [shape = 'f32[8,128]{1,0:T(8,128)}', space=vmem, size = 0x1000, scoped, tag = 'scratch operand']
  #allocation3 [shape = 'f32[8,128]{1,0:T(8,128)}', space=vmem, size = 0x1000, scoped, tag = 'scratch operand']
  %s0 = inlined_call_operand.vmem [shape: bf16[8,8,4], index: 0, kind: input, shape index: {}]
  %s1 = inlined_call_operand.vmem [shape: bf16[4,512], index: 1, kind: input, shape index: {}]
  %s2 = inlined_call_operand.hbm [shape: bf16[128,512], index: 2, kind: input, shape index: {}]
  %s3 = inlined_call_operand.vmem [shape: f32[1,512], index: 3, kind: input, shape index: {}]
  %s4 = inlined_call_operand.hbm [shape: bf16[128,128], index: 4, kind: input, shape index: {}]
  %s5 = inlined_call_operand.vmem [shape: f32[1,128], index: 5, kind: input, shape index: {}]
  %s6 = inlined_call_operand.hbm [shape: f32[8,128], index: 6, kind: output, shape index: {}]
  %s7 = sld [smem:[#allocation0]]
  $region50: #{tpu_custom_call.1} parent=0
    _
  %s9 = ssub.s32 1, %s7
  %s10 = scalar_select 0, %s9, %s7
  $region1: #{tpu_custom_call.1} parent=0
    #allocation4 [shape = 'u8[131072]{0}', space=vmem, size = 0x20000, scoped, tag = 'input window, operand 2, single buffered']
    #allocation5 [shape = 's32[1]{0}', space=sflag, size = 0x4, scoped, tag = 'scoped memory for tpu_custom_call.1']
    #allocation6 [shape = 's32[1]{0}', space=sflag, size = 0x4, scoped, tag = 'scoped memory for tpu_custom_call.1']
    #allocation7 [shape = 'u8[32768]{0}', space=vmem, size = 0x8000, scoped, tag = 'input window, operand 4, single buffered']
    #allocation8 [shape = 's32[1]{0}', space=sflag, size = 0x4, scoped, tag = 'scoped memory for tpu_custom_call.1']
    #allocation9 [shape = 'u8[4096]{0}', space=vmem, size = 0x1000, scoped, tag = 'output window, operand 0, single buffered']
    %11 = vsyncpa [#allocation5], 0
    %12 = vsyncpa [#allocation8], 0
    %13 = vsyncpa [#allocation6], 0
    // Predicated region
    $region2: #{tpu_custom_call.1} parent=1 // pred_check
      _
    $region3: #{tpu_custom_call.1} parent=1 // pred_check_branch
      %15 = sbr.rel (0) target = $region5
    $region4: #{tpu_custom_call.1} parent=1 // pred_region
      _
    $region5: #{tpu_custom_call.1} parent=1 // pred_fallthru
      _
    // Predicated region
    $region6: #{tpu_custom_call.1} parent=1 // pred_check
      _
    $region7: #{tpu_custom_call.1} parent=1 // pred_check_branch
      %17 = sbr.rel (0) target = $region9
    $region8: #{tpu_custom_call.1} parent=1 // pred_region
      _
    $region9: #{tpu_custom_call.1} parent=1 // pred_fallthru
      _
    // Predicated region
    $region10: #{tpu_custom_call.1} parent=1 // pred_check
      _
    $region11: #{tpu_custom_call.1} parent=1 // pred_check_branch
      %19 = sbr.rel (0) target = $region13
    $region12: #{tpu_custom_call.1} parent=1 // pred_region
      %s21 = ssub.s32 4096, 4096
      %22 = vsyncadd [#allocation5], %s21
      %s23 = sshll.u32 [#allocation4], 4
      %s24 = int_to_ptr.vmem [resolvable:$true] %s23
      %29 = dma.hbm_to_vmem [thread:$0]  %s2, 4096, %s24, [#allocation5], 256, 256, 16
    $region13: #{tpu_custom_call.1} parent=1 // pred_fallthru
      _
    // Predicated region
    $region14: #{tpu_custom_call.1} parent=1 // pred_check
      _
    $region15: #{tpu_custom_call.1} parent=1 // pred_check_branch
      %31 = sbr.rel (0) target = $region17
    $region16: #{tpu_custom_call.1} parent=1 // pred_region
      _
    $region17: #{tpu_custom_call.1} parent=1 // pred_fallthru
      _
    // Predicated region
    $region18: #{tpu_custom_call.1} parent=1 // pred_check
      _
    $region19: #{tpu_custom_call.1} parent=1 // pred_check_branch
      %33 = sbr.rel (0) target = $region21
    $region20: #{tpu_custom_call.1} parent=1 // pred_region
      %s35 = ssub.s32 1024, 1024
      %36 = vsyncadd [#allocation8], %s35
      %s37 = sshll.u32 [#allocation7], 4
      %s38 = int_to_ptr.vmem [resolvable:$true] %s37
      %43 = dma.hbm_to_vmem [thread:$0]  %s4, 1024, %s38, [#allocation8], 64, 64, 4
    $region21: #{tpu_custom_call.1} parent=1 // pred_fallthru
      _
    // Predicated region
    $region22: #{tpu_custom_call.1} parent=1 // pred_check
      _
    $region23: #{tpu_custom_call.1} parent=1 // pred_check_branch
      %45 = sbr.rel (0) target = $region25
    $region24: #{tpu_custom_call.1} parent=1 // pred_region
      _
    $region25: #{tpu_custom_call.1} parent=1 // pred_fallthru
      _
    // Predicated region
    $region26: #{tpu_custom_call.1} parent=1 // pred_check
      _
    $region27: #{tpu_custom_call.1} parent=1 // pred_check_branch
      %47 = sbr.rel (0) target = $region29
    $region28: #{tpu_custom_call.1} parent=1 // pred_region
      %48 = dma.done [#allocation5], 4096
    $region29: #{tpu_custom_call.1} parent=1 // pred_fallthru
      _
    // Predicated region
    $region30: #{tpu_custom_call.1} parent=1 // pred_check
      _
    $region31: #{tpu_custom_call.1} parent=1 // pred_check_branch
      %50 = sbr.rel (0) target = $region33
    $region32: #{tpu_custom_call.1} parent=1 // pred_region
      %51 = dma.done [#allocation8], 1024
    $region33: #{tpu_custom_call.1} parent=1 // pred_fallthru
      _
    %p53 = scmp.eq.s32.totalorder 0, 0
    // Predicated region
    $region34: #{tpu_custom_call.1} parent=1 // pred_check
      %p54 = pneg %p53
    $region35: #{tpu_custom_call.1} parent=1 // pred_check_branch
      %56 = sbr.rel (%p54) target = $region37
    $region36: #{tpu_custom_call.1} parent=1 // pred_region
      %57 = vst [vmem:[#allocation2] sm:$0xff] 0.0
      %58 = vst [vmem:[#allocation3] sm:$0xff] 0.0
    $region37: #{tpu_custom_call.1} parent=1 // pred_fallthru
      _
    %v59 = vld [vmem:[%s1] sm:$0xff]
    %v60 = vld [vmem:[#allocation4] sm:$0xff]
    %v61 = vld [vmem:[#allocation4 + $0x8] sm:$0xff]
    %v62 = vld [vmem:[#allocation4 + $0x10] sm:$0xff]
    %v63 = vld [vmem:[#allocation4 + $0x18] sm:$0xff]
    %v64 = vld [vmem:[#allocation4 + $0x20] sm:$0xff]
    %v65 = vld [vmem:[#allocation4 + $0x28] sm:$0xff]
    %v66 = vld [vmem:[#allocation4 + $0x30] sm:$0xff]
    %v67 = vld [vmem:[#allocation4 + $0x38] sm:$0xff]
    %v68 = vld [vmem:[#allocation4 + $0x40] sm:$0xff]
    %v69 = vld [vmem:[#allocation4 + $0x48] sm:$0xff]
    %v70 = vld [vmem:[#allocation4 + $0x50] sm:$0xff]
    %v71 = vld [vmem:[#allocation4 + $0x58] sm:$0xff]
    %v72 = vld [vmem:[#allocation4 + $0x60] sm:$0xff]
    %v73 = vld [vmem:[#allocation4 + $0x68] sm:$0xff]
    %v74 = vld [vmem:[#allocation4 + $0x70] sm:$0xff]
    %v75 = vld [vmem:[#allocation4 + $0x78] sm:$0xff]
    %v76 = vld [vmem:[#allocation4 + $0x80] sm:$0xff]
    %v77 = vld [vmem:[#allocation4 + $0x88] sm:$0xff]
    %v78 = vld [vmem:[#allocation4 + $0x90] sm:$0xff]
    %v79 = vld [vmem:[#allocation4 + $0x98] sm:$0xff]
    %v80 = vld [vmem:[#allocation4 + $0xa0] sm:$0xff]
    %v81 = vld [vmem:[#allocation4 + $0xa8] sm:$0xff]
    %v82 = vld [vmem:[#allocation4 + $0xb0] sm:$0xff]
    %v83 = vld [vmem:[#allocation4 + $0xb8] sm:$0xff]
    %v84 = vld [vmem:[#allocation4 + $0xc0] sm:$0xff]
    %v85 = vld [vmem:[#allocation4 + $0xc8] sm:$0xff]
    %v86 = vld [vmem:[#allocation4 + $0xd0] sm:$0xff]
    %v87 = vld [vmem:[#allocation4 + $0xd8] sm:$0xff]
    %v88 = vld [vmem:[#allocation4 + $0xe0] sm:$0xff]
    %v89 = vld [vmem:[#allocation4 + $0xe8] sm:$0xff]
    %v90 = vld [vmem:[#allocation4 + $0xf0] sm:$0xff]
    %v91 = vld [vmem:[#allocation4 + $0xf8] sm:$0xff]
    %v92 = vld [vmem:[%s3] sm:$0xf]
    %v94 = vlaneseq
    %v95 = vshrl.u32 %v94, 7
    %v96 = vsub.s32 0, %v95
    %v97 = vrot.slane %v92, %v96
    %v98 = vlaneseq
    %v99 = vshrl.u32 %v98, 7
    %v100 = vsub.s32 1, %v99
    %v101 = vrot.slane %v92, %v100
    %v102 = vlaneseq
    %v103 = vshrl.u32 %v102, 7
    %v104 = vsub.s32 2, %v103
    %v105 = vrot.slane %v92, %v104
    %v106 = vlaneseq
    %v107 = vshrl.u32 %v106, 7
    %v108 = vsub.s32 3, %v107
    %v109 = vrot.slane %v92, %v108
    %v114 = vld [vmem:[#allocation2] sm:$0xff]
    %v115 = vld [vmem:[#allocation3] sm:$0xff]
    %v116 = vld [vmem:[%s0] sm:$0xf]
    %v117 = vpack.c.bf16 %v114, %v114
    %v150 = vunpack.c.l.b16 %v60
    %v151 = vunpack.c.h.b16 %v60
    %v152 = vunpack.c.l.b16 %v61
    %v153 = vunpack.c.h.b16 %v61
    %v154 = vunpack.c.l.b16 %v62
    %v155 = vunpack.c.h.b16 %v62
    %v156 = vunpack.c.l.b16 %v63
    %v157 = vunpack.c.h.b16 %v63
    %v158 = vunpack.c.l.b16 %v64
    %v159 = vunpack.c.h.b16 %v64
    %v160 = vunpack.c.l.b16 %v65
    %v161 = vunpack.c.h.b16 %v65
    %v162 = vunpack.c.l.b16 %v66
    %v163 = vunpack.c.h.b16 %v66
    %v164 = vunpack.c.l.b16 %v67
    %v165 = vunpack.c.h.b16 %v67
    %v166 = vunpack.c.l.b16 %v68
    %v167 = vunpack.c.h.b16 %v68
    %v168 = vunpack.c.l.b16 %v69
    %v169 = vunpack.c.h.b16 %v69
    %v170 = vunpack.c.l.b16 %v70
    %v171 = vunpack.c.h.b16 %v70
    %v172 = vunpack.c.l.b16 %v71
    %v173 = vunpack.c.h.b16 %v71
    %v174 = vunpack.c.l.b16 %v72
    %v175 = vunpack.c.h.b16 %v72
    %v176 = vunpack.c.l.b16 %v73
    %v177 = vunpack.c.h.b16 %v73
    %v178 = vunpack.c.l.b16 %v74
    %v179 = vunpack.c.h.b16 %v74
    %v180 = vunpack.c.l.b16 %v75
    %v181 = vunpack.c.h.b16 %v75
    %v182 = vunpack.c.l.b16 %v76
    %v183 = vunpack.c.h.b16 %v76
    %v184 = vunpack.c.l.b16 %v77
    %v185 = vunpack.c.h.b16 %v77
    %v186 = vunpack.c.l.b16 %v78
    %v187 = vunpack.c.h.b16 %v78
    %v188 = vunpack.c.l.b16 %v79
    %v189 = vunpack.c.h.b16 %v79
    %v190 = vunpack.c.l.b16 %v80
    %v191 = vunpack.c.h.b16 %v80
    %v192 = vunpack.c.l.b16 %v81
    %v193 = vunpack.c.h.b16 %v81
    %v194 = vunpack.c.l.b16 %v82
    %v195 = vunpack.c.h.b16 %v82
    %v196 = vunpack.c.l.b16 %v83
    %v197 = vunpack.c.h.b16 %v83
    %v198 = vunpack.c.l.b16 %v84
    %v199 = vunpack.c.h.b16 %v84
    %v200 = vunpack.c.l.b16 %v85
    %v201 = vunpack.c.h.b16 %v85
    %v202 = vunpack.c.l.b16 %v86
    %v203 = vunpack.c.h.b16 %v86
    %v204 = vunpack.c.l.b16 %v87
    %v205 = vunpack.c.h.b16 %v87
    %v206 = vunpack.c.l.b16 %v88
    %v207 = vunpack.c.h.b16 %v88
    %v208 = vunpack.c.l.b16 %v89
    %v209 = vunpack.c.h.b16 %v89
    %v210 = vunpack.c.l.b16 %v90
    %v211 = vunpack.c.h.b16 %v90
    %v212 = vunpack.c.l.b16 %v91
    %v213 = vunpack.c.h.b16 %v91
    %v214 = vpack.c.b16 %v154, %v150
    %v215 = vpack.c.b16 %v155, %v151
    %v216 = vpack.c.b16 %v156, %v152
    %v217 = vpack.c.b16 %v157, %v153
    %v218 = vpack.c.b16 %v162, %v158
    %v219 = vpack.c.b16 %v163, %v159
    %v220 = vpack.c.b16 %v164, %v160
    %v221 = vpack.c.b16 %v165, %v161
    %v222 = vpack.c.b16 %v170, %v166
    %v223 = vpack.c.b16 %v171, %v167
    %v224 = vpack.c.b16 %v172, %v168
    %v225 = vpack.c.b16 %v173, %v169
    %v226 = vpack.c.b16 %v178, %v174
    %v227 = vpack.c.b16 %v179, %v175
    %v228 = vpack.c.b16 %v180, %v176
    %v229 = vpack.c.b16 %v181, %v177
    %v230 = vpack.c.b16 %v186, %v182
    %v231 = vpack.c.b16 %v187, %v183
    %v232 = vpack.c.b16 %v188, %v184
    %v233 = vpack.c.b16 %v189, %v185
    %v234 = vpack.c.b16 %v194, %v190
    %v235 = vpack.c.b16 %v195, %v191
    %v236 = vpack.c.b16 %v196, %v192
    %v237 = vpack.c.b16 %v197, %v193
    %v238 = vpack.c.b16 %v202, %v198
    %v239 = vpack.c.b16 %v203, %v199
    %v240 = vpack.c.b16 %v204, %v200
    %v241 = vpack.c.b16 %v205, %v201
    %v242 = vpack.c.b16 %v210, %v206
    %v243 = vpack.c.b16 %v211, %v207
    %v244 = vpack.c.b16 %v212, %v208
    %v245 = vpack.c.b16 %v213, %v209
    %278 = vmatprep.subr.bf16.mxu0 %v215
    %279 = vmatpush1.bf16.msra.mxu0 %v214
    %280 = vmatprep.subr.bf16.mxu0 %v219
    %281 = vmatpush1.bf16.msra.mxu0 %v218
    %282 = vmatprep.subr.bf16.mxu0 %v223
    %283 = vmatpush1.bf16.msra.mxu0 %v222
    %284 = vmatprep.subr.bf16.mxu0 %v227
    %285 = vmatpush1.bf16.msra.mxu0 %v226
    %286 = vmatprep.subr.bf16.mxu0 %v231
    %287 = vmatpush1.bf16.msra.mxu0 %v230
    %288 = vmatprep.subr.bf16.mxu0 %v235
    %289 = vmatpush1.bf16.msra.mxu0 %v234
    %290 = vmatprep.subr.bf16.mxu0 %v239
    %291 = vmatpush1.bf16.msra.mxu0 %v238
    %292 = vmatprep.subr.bf16.mxu0 %v243
    %293 = vmatpush1.bf16.msra.mxu0 %v242
    %294 = vmatprep.subr.bf16.mxu0 0
    %295 = vmatpush1.bf16.msra.mxu0 0
    %296 = vmatprep.subr.bf16.mxu0 0
    %297 = vmatpush1.bf16.msra.mxu0 0
    %298 = vmatprep.subr.bf16.mxu0 0
    %299 = vmatpush1.bf16.msra.mxu0 0
    %300 = vmatprep.subr.bf16.mxu0 0
    %301 = vmatpush1.bf16.msra.mxu0 0
    %302 = vmatprep.subr.bf16.mxu0 0
    %303 = vmatpush1.bf16.msra.mxu0 0
    %304 = vmatprep.subr.bf16.mxu0 0
    %305 = vmatpush1.bf16.msra.mxu0 0
    %306 = vmatprep.subr.bf16.mxu0 0
    %307 = vmatpush1.bf16.msra.mxu0 0
    %308 = vmatprep.subr.bf16.mxu0 0
    %309 = vmatpush1.bf16.msra.mxu0 0
    %310 = vmatprep.mubr.bf16.mxu0 0
    %311 = vmatmul.mubr.bf16.gmra.mrb[0].mxu0 %v117
    %v312 = vpop.f32.mrb[0].mxu0
    %v313 = vadd.f32 0.0, %v312
    %v314 = vpop.f32.mrb[0].mxu0
    %v315 = vadd.f32 0.0, %v314
    %v316 = vpop.f32.mrb[0].mxu0
    %v317 = vpop.f32.mrb[0].mxu0
    %318 = vdwg.mxu0
    %319 = vmatprep.subr.bf16.mxu0 %v217
    %320 = vmatpush1.bf16.msra.mxu0 %v216
    %321 = vmatprep.subr.bf16.mxu0 %v221
    %322 = vmatpush1.bf16.msra.mxu0 %v220
    %323 = vmatprep.subr.bf16.mxu0 %v225
    %324 = vmatpush1.bf16.msra.mxu0 %v224
    %325 = vmatprep.subr.bf16.mxu0 %v229
    %326 = vmatpush1.bf16.msra.mxu0 %v228
    %327 = vmatprep.subr.bf16.mxu0 %v233
    %328 = vmatpush1.bf16.msra.mxu0 %v232
    %329 = vmatprep.subr.bf16.mxu0 %v237
    %330 = vmatpush1.bf16.msra.mxu0 %v236
    %331 = vmatprep.subr.bf16.mxu0 %v241
    %332 = vmatpush1.bf16.msra.mxu0 %v240
    %333 = vmatprep.subr.bf16.mxu0 %v245
    %334 = vmatpush1.bf16.msra.mxu0 %v244
    %335 = vmatprep.subr.bf16.mxu0 0
    %336 = vmatpush1.bf16.msra.mxu0 0
    %337 = vmatprep.subr.bf16.mxu0 0
    %338 = vmatpush1.bf16.msra.mxu0 0
    %339 = vmatprep.subr.bf16.mxu0 0
    %340 = vmatpush1.bf16.msra.mxu0 0
    %341 = vmatprep.subr.bf16.mxu0 0
    %342 = vmatpush1.bf16.msra.mxu0 0
    %343 = vmatprep.subr.bf16.mxu0 0
    %344 = vmatpush1.bf16.msra.mxu0 0
    %345 = vmatprep.subr.bf16.mxu0 0
    %346 = vmatpush1.bf16.msra.mxu0 0
    %347 = vmatprep.subr.bf16.mxu0 0
    %348 = vmatpush1.bf16.msra.mxu0 0
    %349 = vmatprep.subr.bf16.mxu0 0
    %350 = vmatpush1.bf16.msra.mxu0 0
    %351 = vmatprep.mubr.bf16.mxu0 0
    %352 = vmatmul.mubr.bf16.gmra.mrb[0].mxu0 %v117
    %v353 = vpop.f32.mrb[0].mxu0
    %v354 = vadd.f32 0.0, %v353
    %v355 = vpop.f32.mrb[0].mxu0
    %v356 = vadd.f32 0.0, %v355
    %v357 = vpop.f32.mrb[0].mxu0
    %v358 = vpop.f32.mrb[0].mxu0
    %359 = vdwg.mxu0
    %v361 = vcombine.high %v59, %v59
    %v363 = vunpack.c.l.s4 1983009808
    %v364 = vunpack.c.0.s8 %v363
    %v365 = vlaneseq
    %v366 = vshrl.u32 %v365, 7
    %v367 = vsub.s32 %v364, %v366
    %v368 = vrot.slane %v59, %v367
    %v370 = vunpack.c.l.s4 1983009808
    %v371 = vunpack.c.0.s8 %v370
    %v372 = vlaneseq
    %v373 = vshrl.u32 %v372, 7
    %v374 = vsub.s32 %v371, %v373
    %v375 = vrot.slane %v361, %v374
    %v376 = vcombine.high %v368, %v368
    %v377 = vcombine.high %v375, %v375
    %vm378 = vcmask 31744
    %v380 = vsel %vm378, %v116, 0
    %vm382 = vcmask 1041408
    %v384 = vsel %vm382, %v368, 0
    %v387 = vsel %vm382, %v376, 0
    %v390 = vsel %vm382, %v375, 0
    %v393 = vsel %vm382, %v377, 0
    %395 = vmatprep.subr.bf16.mxu0 %v387
    %396 = vmatpush1.bf16.msra.mxu0 %v384
    %397 = vmatprep.subr.bf16.mxu0 0
    %398 = vmatpush1.bf16.msra.mxu0 0
    %399 = vmatprep.subr.bf16.mxu0 0
    %400 = vmatpush1.bf16.msra.mxu0 0
    %401 = vmatprep.subr.bf16.mxu0 0
    %402 = vmatpush1.bf16.msra.mxu0 0
    %403 = vmatprep.subr.bf16.mxu0 0
    %404 = vmatpush1.bf16.msra.mxu0 0
    %405 = vmatprep.subr.bf16.mxu0 0
    %406 = vmatpush1.bf16.msra.mxu0 0
    %407 = vmatprep.subr.bf16.mxu0 0
    %408 = vmatpush1.bf16.msra.mxu0 0
    %409 = vmatprep.subr.bf16.mxu0 0
    %410 = vmatpush1.bf16.msra.mxu0 0
    %411 = vmatprep.subr.bf16.mxu0 0
    %412 = vmatpush1.bf16.msra.mxu0 0
    %413 = vmatprep.subr.bf16.mxu0 0
    %414 = vmatpush1.bf16.msra.mxu0 0
    %415 = vmatprep.subr.bf16.mxu0 0
    %416 = vmatpush1.bf16.msra.mxu0 0
    %417 = vmatprep.subr.bf16.mxu0 0
    %418 = vmatpush1.bf16.msra.mxu0 0
    %419 = vmatprep.subr.bf16.mxu0 0
    %420 = vmatpush1.bf16.msra.mxu0 0
    %421 = vmatprep.subr.bf16.mxu0 0
    %422 = vmatpush1.bf16.msra.mxu0 0
    %423 = vmatprep.subr.bf16.mxu0 0
    %424 = vmatpush1.bf16.msra.mxu0 0
    %425 = vmatprep.subr.bf16.mxu0 0
    %426 = vmatpush1.bf16.msra.mxu0 0
    %427 = vmatprep.mubr.bf16.mxu0 0
    %428 = vmatmul.mubr.bf16.gmra.mrb[0].mxu0 %v380
    %v429 = vpop.f32.mrb[0].mxu0
    %v430 = vadd.f32 %v313, %v429
    %v431 = vpop.f32.mrb[0].mxu0
    %v432 = vadd.f32 %v315, %v431
    %v433 = vpop.f32.mrb[0].mxu0
    %v434 = vpop.f32.mrb[0].mxu0
    %435 = vdwg.mxu0
    %436 = vmatprep.subr.bf16.mxu0 %v393
    %437 = vmatpush1.bf16.msra.mxu0 %v390
    %438 = vmatprep.subr.bf16.mxu0 0
    %439 = vmatpush1.bf16.msra.mxu0 0
    %440 = vmatprep.subr.bf16.mxu0 0
    %441 = vmatpush1.bf16.msra.mxu0 0
    %442 = vmatprep.subr.bf16.mxu0 0
    %443 = vmatpush1.bf16.msra.mxu0 0
    %444 = vmatprep.subr.bf16.mxu0 0
    %445 = vmatpush1.bf16.msra.mxu0 0
    %446 = vmatprep.subr.bf16.mxu0 0
    %447 = vmatpush1.bf16.msra.mxu0 0
    %448 = vmatprep.subr.bf16.mxu0 0
    %449 = vmatpush1.bf16.msra.mxu0 0
    %450 = vmatprep.subr.bf16.mxu0 0
    %451 = vmatpush1.bf16.msra.mxu0 0
    %452 = vmatprep.subr.bf16.mxu0 0
    %453 = vmatpush1.bf16.msra.mxu0 0
    %454 = vmatprep.subr.bf16.mxu0 0
    %455 = vmatpush1.bf16.msra.mxu0 0
    %456 = vmatprep.subr.bf16.mxu0 0
    %457 = vmatpush1.bf16.msra.mxu0 0
    %458 = vmatprep.subr.bf16.mxu0 0
    %459 = vmatpush1.bf16.msra.mxu0 0
    %460 = vmatprep.subr.bf16.mxu0 0
    %461 = vmatpush1.bf16.msra.mxu0 0
    %462 = vmatprep.subr.bf16.mxu0 0
    %463 = vmatpush1.bf16.msra.mxu0 0
    %464 = vmatprep.subr.bf16.mxu0 0
    %465 = vmatpush1.bf16.msra.mxu0 0
    %466 = vmatprep.subr.bf16.mxu0 0
    %467 = vmatpush1.bf16.msra.mxu0 0
    %468 = vmatprep.mubr.bf16.mxu0 0
    %469 = vmatmul.mubr.bf16.gmra.mrb[0].mxu0 %v380
    %v470 = vpop.f32.mrb[0].mxu0
    %v471 = vadd.f32 %v354, %v470
    %v472 = vpop.f32.mrb[0].mxu0
    %v473 = vadd.f32 %v356, %v472
    %v474 = vpop.f32.mrb[0].mxu0
    %v475 = vpop.f32.mrb[0].mxu0
    %476 = vdwg.mxu0
    %v477 = vadd.f32 %v430, %v97
    %v478 = vadd.f32 %v432, %v101
    %v479 = vadd.f32 %v471, %v105
    %v480 = vadd.f32 %v473, %v109
    %v481 = vxor.u32 %v477, 2147483648
    %v482 = vmul.f32 %v481, 1.442695
    %v483 = vpow.pop %v482
    %v484 = vadd.f32 %v483, 1.0
    %v485 = vrcp.pop %v484
    %v486 = vmul.f32 1.0, %v485
    %v487 = vxor.u32 %v478, 2147483648
    %v488 = vmul.f32 %v487, 1.442695
    %v489 = vpow.pop %v488
    %v490 = vadd.f32 %v489, 1.0
    %v491 = vrcp.pop %v490
    %v492 = vmul.f32 1.0, %v491
    %v493 = vtanh.pop %v479
    %v494 = vxor.u32 %v480, 2147483648
    %v495 = vmul.f32 %v494, 1.442695
    %v496 = vpow.pop %v495
    %v497 = vadd.f32 %v496, 1.0
    %v498 = vrcp.pop %v497
    %v499 = vmul.f32 1.0, %v498
    %v500 = vmul.f32 %v492, %v115
    %v501 = vmul.f32 %v486, %v493
    %v502 = vadd.f32 %v500, %v501
    %v503 = vtanh.pop %v502
    %v504 = vmul.f32 %v499, %v503
    %s505 = scalar_lea.vmem %s0, 4
    %v506 = vld [vmem:[%s505] sm:$0xf]
    %v507 = vpack.c.bf16 %v504, %v504
    %508 = vmatprep.subr.bf16.mxu0 %v215
    %509 = vmatpush1.bf16.msra.mxu0 %v214
    %510 = vmatprep.subr.bf16.mxu0 %v219
    %511 = vmatpush1.bf16.msra.mxu0 %v218
    %512 = vmatprep.subr.bf16.mxu0 %v223
    %513 = vmatpush1.bf16.msra.mxu0 %v222
    %514 = vmatprep.subr.bf16.mxu0 %v227
    %515 = vmatpush1.bf16.msra.mxu0 %v226
    %516 = vmatprep.subr.bf16.mxu0 %v231
    %517 = vmatpush1.bf16.msra.mxu0 %v230
    %518 = vmatprep.subr.bf16.mxu0 %v235
    %519 = vmatpush1.bf16.msra.mxu0 %v234
    %520 = vmatprep.subr.bf16.mxu0 %v239
    %521 = vmatpush1.bf16.msra.mxu0 %v238
    %522 = vmatprep.subr.bf16.mxu0 %v243
    %523 = vmatpush1.bf16.msra.mxu0 %v242
    %524 = vmatprep.subr.bf16.mxu0 0
    %525 = vmatpush1.bf16.msra.mxu0 0
    %526 = vmatprep.subr.bf16.mxu0 0
    %527 = vmatpush1.bf16.msra.mxu0 0
    %528 = vmatprep.subr.bf16.mxu0 0
    %529 = vmatpush1.bf16.msra.mxu0 0
    %530 = vmatprep.subr.bf16.mxu0 0
    %531 = vmatpush1.bf16.msra.mxu0 0
    %532 = vmatprep.subr.bf16.mxu0 0
    %533 = vmatpush1.bf16.msra.mxu0 0
    %534 = vmatprep.subr.bf16.mxu0 0
    %535 = vmatpush1.bf16.msra.mxu0 0
    %536 = vmatprep.subr.bf16.mxu0 0
    %537 = vmatpush1.bf16.msra.mxu0 0
    %538 = vmatprep.subr.bf16.mxu0 0
    %539 = vmatpush1.bf16.msra.mxu0 0
    %540 = vmatprep.mubr.bf16.mxu0 0
    %541 = vmatmul.mubr.bf16.gmra.mrb[0].mxu0 %v507
    %v542 = vpop.f32.mrb[0].mxu0
    %v543 = vadd.f32 0.0, %v542
    %v544 = vpop.f32.mrb[0].mxu0
    %v545 = vadd.f32 0.0, %v544
    %v546 = vpop.f32.mrb[0].mxu0
    %v547 = vpop.f32.mrb[0].mxu0
    %548 = vdwg.mxu0
    %549 = vmatprep.subr.bf16.mxu0 %v217
    %550 = vmatpush1.bf16.msra.mxu0 %v216
    %551 = vmatprep.subr.bf16.mxu0 %v221
    %552 = vmatpush1.bf16.msra.mxu0 %v220
    %553 = vmatprep.subr.bf16.mxu0 %v225
    %554 = vmatpush1.bf16.msra.mxu0 %v224
    %555 = vmatprep.subr.bf16.mxu0 %v229
    %556 = vmatpush1.bf16.msra.mxu0 %v228
    %557 = vmatprep.subr.bf16.mxu0 %v233
    %558 = vmatpush1.bf16.msra.mxu0 %v232
    %559 = vmatprep.subr.bf16.mxu0 %v237
    %560 = vmatpush1.bf16.msra.mxu0 %v236
    %561 = vmatprep.subr.bf16.mxu0 %v241
    %562 = vmatpush1.bf16.msra.mxu0 %v240
    %563 = vmatprep.subr.bf16.mxu0 %v245
    %564 = vmatpush1.bf16.msra.mxu0 %v244
    %565 = vmatprep.subr.bf16.mxu0 0
    %566 = vmatpush1.bf16.msra.mxu0 0
    %567 = vmatprep.subr.bf16.mxu0 0
    %568 = vmatpush1.bf16.msra.mxu0 0
    %569 = vmatprep.subr.bf16.mxu0 0
    %570 = vmatpush1.bf16.msra.mxu0 0
    %571 = vmatprep.subr.bf16.mxu0 0
    %572 = vmatpush1.bf16.msra.mxu0 0
    %573 = vmatprep.subr.bf16.mxu0 0
    %574 = vmatpush1.bf16.msra.mxu0 0
    %575 = vmatprep.subr.bf16.mxu0 0
    %576 = vmatpush1.bf16.msra.mxu0 0
    %577 = vmatprep.subr.bf16.mxu0 0
    %578 = vmatpush1.bf16.msra.mxu0 0
    %579 = vmatprep.subr.bf16.mxu0 0
    %580 = vmatpush1.bf16.msra.mxu0 0
    %581 = vmatprep.mubr.bf16.mxu0 0
    %582 = vmatmul.mubr.bf16.gmra.mrb[0].mxu0 %v507
    %v583 = vpop.f32.mrb[0].mxu0
    %v584 = vadd.f32 0.0, %v583
    %v585 = vpop.f32.mrb[0].mxu0
    %v586 = vadd.f32 0.0, %v585
    %v587 = vpop.f32.mrb[0].mxu0
    %v588 = vpop.f32.mrb[0].mxu0
    %589 = vdwg.mxu0
    %v591 = vsel %vm378, %v506, 0
    %593 = vmatprep.subr.bf16.mxu0 %v387
    %594 = vmatpush1.bf16.msra.mxu0 %v384
    %595 = vmatprep.subr.bf16.mxu0 0
    %596 = vmatpush1.bf16.msra.mxu0 0
    %597 = vmatprep.subr.bf16.mxu0 0
    %598 = vmatpush1.bf16.msra.mxu0 0
    %599 = vmatprep.subr.bf16.mxu0 0
    %600 = vmatpush1.bf16.msra.mxu0 0
    %601 = vmatprep.subr.bf16.mxu0 0
    %602 = vmatpush1.bf16.msra.mxu0 0
    %603 = vmatprep.subr.bf16.mxu0 0
    %604 = vmatpush1.bf16.msra.mxu0 0
    %605 = vmatprep.subr.bf16.mxu0 0
    %606 = vmatpush1.bf16.msra.mxu0 0
    %607 = vmatprep.subr.bf16.mxu0 0
    %608 = vmatpush1.bf16.msra.mxu0 0
    %609 = vmatprep.subr.bf16.mxu0 0
    %610 = vmatpush1.bf16.msra.mxu0 0
    %611 = vmatprep.subr.bf16.mxu0 0
    %612 = vmatpush1.bf16.msra.mxu0 0
    %613 = vmatprep.subr.bf16.mxu0 0
    %614 = vmatpush1.bf16.msra.mxu0 0
    %615 = vmatprep.subr.bf16.mxu0 0
    %616 = vmatpush1.bf16.msra.mxu0 0
    %617 = vmatprep.subr.bf16.mxu0 0
    %618 = vmatpush1.bf16.msra.mxu0 0
    %619 = vmatprep.subr.bf16.mxu0 0
    %620 = vmatpush1.bf16.msra.mxu0 0
    %621 = vmatprep.subr.bf16.mxu0 0
    %622 = vmatpush1.bf16.msra.mxu0 0
    %623 = vmatprep.subr.bf16.mxu0 0
    %624 = vmatpush1.bf16.msra.mxu0 0
    %625 = vmatprep.mubr.bf16.mxu0 0
    %626 = vmatmul.mubr.bf16.gmra.mrb[0].mxu0 %v591
    %v627 = vpop.f32.mrb[0].mxu0
    %v628 = vadd.f32 %v543, %v627
    %v629 = vpop.f32.mrb[0].mxu0
    %v630 = vadd.f32 %v545, %v629
    %v631 = vpop.f32.mrb[0].mxu0
    %v632 = vpop.f32.mrb[0].mxu0
    %633 = vdwg.mxu0
    %634 = vmatprep.subr.bf16.mxu0 %v393
    %635 = vmatpush1.bf16.msra.mxu0 %v390
    %636 = vmatprep.subr.bf16.mxu0 0
    %637 = vmatpush1.bf16.msra.mxu0 0
    %638 = vmatprep.subr.bf16.mxu0 0
    %639 = vmatpush1.bf16.msra.mxu0 0
    %640 = vmatprep.subr.bf16.mxu0 0
    %641 = vmatpush1.bf16.msra.mxu0 0
    %642 = vmatprep.subr.bf16.mxu0 0
    %643 = vmatpush1.bf16.msra.mxu0 0
    %644 = vmatprep.subr.bf16.mxu0 0
    %645 = vmatpush1.bf16.msra.mxu0 0
    %646 = vmatprep.subr.bf16.mxu0 0
    %647 = vmatpush1.bf16.msra.mxu0 0
    %648 = vmatprep.subr.bf16.mxu0 0
    %649 = vmatpush1.bf16.msra.mxu0 0
    %650 = vmatprep.subr.bf16.mxu0 0
    %651 = vmatpush1.bf16.msra.mxu0 0
    %652 = vmatprep.subr.bf16.mxu0 0
    %653 = vmatpush1.bf16.msra.mxu0 0
    %654 = vmatprep.subr.bf16.mxu0 0
    %655 = vmatpush1.bf16.msra.mxu0 0
    %656 = vmatprep.subr.bf16.mxu0 0
    %657 = vmatpush1.bf16.msra.mxu0 0
    %658 = vmatprep.subr.bf16.mxu0 0
    %659 = vmatpush1.bf16.msra.mxu0 0
    %660 = vmatprep.subr.bf16.mxu0 0
    %661 = vmatpush1.bf16.msra.mxu0 0
    %662 = vmatprep.subr.bf16.mxu0 0
    %663 = vmatpush1.bf16.msra.mxu0 0
    %664 = vmatprep.subr.bf16.mxu0 0
    %665 = vmatpush1.bf16.msra.mxu0 0
    %666 = vmatprep.mubr.bf16.mxu0 0
    %667 = vmatmul.mubr.bf16.gmra.mrb[0].mxu0 %v591
    %v668 = vpop.f32.mrb[0].mxu0
    %v669 = vadd.f32 %v584, %v668
    %v670 = vpop.f32.mrb[0].mxu0
    %v671 = vadd.f32 %v586, %v670
    %v672 = vpop.f32.mrb[0].mxu0
    %v673 = vpop.f32.mrb[0].mxu0
    %674 = vdwg.mxu0
    %v675 = vadd.f32 %v628, %v97
    %v676 = vadd.f32 %v630, %v101
    %v677 = vadd.f32 %v669, %v105
    %v678 = vadd.f32 %v671, %v109
    %v679 = vxor.u32 %v675, 2147483648
    %v680 = vmul.f32 %v679, 1.442695
    %v681 = vpow.pop %v680
    %v682 = vadd.f32 %v681, 1.0
    %v683 = vrcp.pop %v682
    %v684 = vmul.f32 1.0, %v683
    %v685 = vxor.u32 %v676, 2147483648
    %v686 = vmul.f32 %v685, 1.442695
    %v687 = vpow.pop %v686
    %v688 = vadd.f32 %v687, 1.0
    %v689 = vrcp.pop %v688
    %v690 = vmul.f32 1.0, %v689
    %v691 = vtanh.pop %v677
    %v692 = vxor.u32 %v678, 2147483648
    %v693 = vmul.f32 %v692, 1.442695
    %v694 = vpow.pop %v693
    %v695 = vadd.f32 %v694, 1.0
    %v696 = vrcp.pop %v695
    %v697 = vmul.f32 1.0, %v696
    %v698 = vmul.f32 %v690, %v502
    %v699 = vmul.f32 %v684, %v691
    %v700 = vadd.f32 %v698, %v699
    %v701 = vtanh.pop %v700
    %v702 = vmul.f32 %v697, %v701
    %s703 = scalar_lea.vmem %s0, 8
    %v704 = vld [vmem:[%s703] sm:$0xf]
    %v705 = vpack.c.bf16 %v702, %v702
    %706 = vmatprep.subr.bf16.mxu0 %v215
    %707 = vmatpush1.bf16.msra.mxu0 %v214
    %708 = vmatprep.subr.bf16.mxu0 %v219
    %709 = vmatpush1.bf16.msra.mxu0 %v218
    %710 = vmatprep.subr.bf16.mxu0 %v223
    %711 = vmatpush1.bf16.msra.mxu0 %v222
    %712 = vmatprep.subr.bf16.mxu0 %v227
    %713 = vmatpush1.bf16.msra.mxu0 %v226
    %714 = vmatprep.subr.bf16.mxu0 %v231
    %715 = vmatpush1.bf16.msra.mxu0 %v230
    %716 = vmatprep.subr.bf16.mxu0 %v235
    %717 = vmatpush1.bf16.msra.mxu0 %v234
    %718 = vmatprep.subr.bf16.mxu0 %v239
    %719 = vmatpush1.bf16.msra.mxu0 %v238
    %720 = vmatprep.subr.bf16.mxu0 %v243
    %721 = vmatpush1.bf16.msra.mxu0 %v242
    %722 = vmatprep.subr.bf16.mxu0 0
    %723 = vmatpush1.bf16.msra.mxu0 0
    %724 = vmatprep.subr.bf16.mxu0 0
    %725 = vmatpush1.bf16.msra.mxu0 0
    %726 = vmatprep.subr.bf16.mxu0 0
    %727 = vmatpush1.bf16.msra.mxu0 0
    %728 = vmatprep.subr.bf16.mxu0 0
    %729 = vmatpush1.bf16.msra.mxu0 0
    %730 = vmatprep.subr.bf16.mxu0 0
    %731 = vmatpush1.bf16.msra.mxu0 0
    %732 = vmatprep.subr.bf16.mxu0 0
    %733 = vmatpush1.bf16.msra.mxu0 0
    %734 = vmatprep.subr.bf16.mxu0 0
    %735 = vmatpush1.bf16.msra.mxu0 0
    %736 = vmatprep.subr.bf16.mxu0 0
    %737 = vmatpush1.bf16.msra.mxu0 0
    %738 = vmatprep.mubr.bf16.mxu0 0
    %739 = vmatmul.mubr.bf16.gmra.mrb[0].mxu0 %v705
    %v740 = vpop.f32.mrb[0].mxu0
    %v741 = vadd.f32 0.0, %v740
    %v742 = vpop.f32.mrb[0].mxu0
    %v743 = vadd.f32 0.0, %v742
    %v744 = vpop.f32.mrb[0].mxu0
    %v745 = vpop.f32.mrb[0].mxu0
    %746 = vdwg.mxu0
    %747 = vmatprep.subr.bf16.mxu0 %v217
    %748 = vmatpush1.bf16.msra.mxu0 %v216
    %749 = vmatprep.subr.bf16.mxu0 %v221
    %750 = vmatpush1.bf16.msra.mxu0 %v220
    %751 = vmatprep.subr.bf16.mxu0 %v225
    %752 = vmatpush1.bf16.msra.mxu0 %v224
    %753 = vmatprep.subr.bf16.mxu0 %v229
    %754 = vmatpush1.bf16.msra.mxu0 %v228
    %755 = vmatprep.subr.bf16.mxu0 %v233
    %756 = vmatpush1.bf16.msra.mxu0 %v232
    %757 = vmatprep.subr.bf16.mxu0 %v237
    %758 = vmatpush1.bf16.msra.mxu0 %v236
    %759 = vmatprep.subr.bf16.mxu0 %v241
    %760 = vmatpush1.bf16.msra.mxu0 %v240
    %761 = vmatprep.subr.bf16.mxu0 %v245
    %762 = vmatpush1.bf16.msra.mxu0 %v244
    %763 = vmatprep.subr.bf16.mxu0 0
    %764 = vmatpush1.bf16.msra.mxu0 0
    %765 = vmatprep.subr.bf16.mxu0 0
    %766 = vmatpush1.bf16.msra.mxu0 0
    %767 = vmatprep.subr.bf16.mxu0 0
    %768 = vmatpush1.bf16.msra.mxu0 0
    %769 = vmatprep.subr.bf16.mxu0 0
    %770 = vmatpush1.bf16.msra.mxu0 0
    %771 = vmatprep.subr.bf16.mxu0 0
    %772 = vmatpush1.bf16.msra.mxu0 0
    %773 = vmatprep.subr.bf16.mxu0 0
    %774 = vmatpush1.bf16.msra.mxu0 0
    %775 = vmatprep.subr.bf16.mxu0 0
    %776 = vmatpush1.bf16.msra.mxu0 0
    %777 = vmatprep.subr.bf16.mxu0 0
    %778 = vmatpush1.bf16.msra.mxu0 0
    %779 = vmatprep.mubr.bf16.mxu0 0
    %780 = vmatmul.mubr.bf16.gmra.mrb[0].mxu0 %v705
    %v781 = vpop.f32.mrb[0].mxu0
    %v782 = vadd.f32 0.0, %v781
    %v783 = vpop.f32.mrb[0].mxu0
    %v784 = vadd.f32 0.0, %v783
    %v785 = vpop.f32.mrb[0].mxu0
    %v786 = vpop.f32.mrb[0].mxu0
    %787 = vdwg.mxu0
    %v789 = vsel %vm378, %v704, 0
    %791 = vmatprep.subr.bf16.mxu0 %v387
    %792 = vmatpush1.bf16.msra.mxu0 %v384
    %793 = vmatprep.subr.bf16.mxu0 0
    %794 = vmatpush1.bf16.msra.mxu0 0
    %795 = vmatprep.subr.bf16.mxu0 0
    %796 = vmatpush1.bf16.msra.mxu0 0
    %797 = vmatprep.subr.bf16.mxu0 0
    %798 = vmatpush1.bf16.msra.mxu0 0
    %799 = vmatprep.subr.bf16.mxu0 0
    %800 = vmatpush1.bf16.msra.mxu0 0
    %801 = vmatprep.subr.bf16.mxu0 0
    %802 = vmatpush1.bf16.msra.mxu0 0
    %803 = vmatprep.subr.bf16.mxu0 0
    %804 = vmatpush1.bf16.msra.mxu0 0
    %805 = vmatprep.subr.bf16.mxu0 0
    %806 = vmatpush1.bf16.msra.mxu0 0
    %807 = vmatprep.subr.bf16.mxu0 0
    %808 = vmatpush1.bf16.msra.mxu0 0
    %809 = vmatprep.subr.bf16.mxu0 0
    %810 = vmatpush1.bf16.msra.mxu0 0
    %811 = vmatprep.subr.bf16.mxu0 0
    %812 = vmatpush1.bf16.msra.mxu0 0
    %813 = vmatprep.subr.bf16.mxu0 0
    %814 = vmatpush1.bf16.msra.mxu0 0
    %815 = vmatprep.subr.bf16.mxu0 0
    %816 = vmatpush1.bf16.msra.mxu0 0
    %817 = vmatprep.subr.bf16.mxu0 0
    %818 = vmatpush1.bf16.msra.mxu0 0
    %819 = vmatprep.subr.bf16.mxu0 0
    %820 = vmatpush1.bf16.msra.mxu0 0
    %821 = vmatprep.subr.bf16.mxu0 0
    %822 = vmatpush1.bf16.msra.mxu0 0
    %823 = vmatprep.mubr.bf16.mxu0 0
    %824 = vmatmul.mubr.bf16.gmra.mrb[0].mxu0 %v789
    %v825 = vpop.f32.mrb[0].mxu0
    %v826 = vadd.f32 %v741, %v825
    %v827 = vpop.f32.mrb[0].mxu0
    %v828 = vadd.f32 %v743, %v827
    %v829 = vpop.f32.mrb[0].mxu0
    %v830 = vpop.f32.mrb[0].mxu0
    %831 = vdwg.mxu0
    %832 = vmatprep.subr.bf16.mxu0 %v393
    %833 = vmatpush1.bf16.msra.mxu0 %v390
    %834 = vmatprep.subr.bf16.mxu0 0
    %835 = vmatpush1.bf16.msra.mxu0 0
    %836 = vmatprep.subr.bf16.mxu0 0
    %837 = vmatpush1.bf16.msra.mxu0 0
    %838 = vmatprep.subr.bf16.mxu0 0
    %839 = vmatpush1.bf16.msra.mxu0 0
    %840 = vmatprep.subr.bf16.mxu0 0
    %841 = vmatpush1.bf16.msra.mxu0 0
    %842 = vmatprep.subr.bf16.mxu0 0
    %843 = vmatpush1.bf16.msra.mxu0 0
    %844 = vmatprep.subr.bf16.mxu0 0
    %845 = vmatpush1.bf16.msra.mxu0 0
    %846 = vmatprep.subr.bf16.mxu0 0
    %847 = vmatpush1.bf16.msra.mxu0 0
    %848 = vmatprep.subr.bf16.mxu0 0
    %849 = vmatpush1.bf16.msra.mxu0 0
    %850 = vmatprep.subr.bf16.mxu0 0
    %851 = vmatpush1.bf16.msra.mxu0 0
    %852 = vmatprep.subr.bf16.mxu0 0
    %853 = vmatpush1.bf16.msra.mxu0 0
    %854 = vmatprep.subr.bf16.mxu0 0
    %855 = vmatpush1.bf16.msra.mxu0 0
    %856 = vmatprep.subr.bf16.mxu0 0
    %857 = vmatpush1.bf16.msra.mxu0 0
    %858 = vmatprep.subr.bf16.mxu0 0
    %859 = vmatpush1.bf16.msra.mxu0 0
    %860 = vmatprep.subr.bf16.mxu0 0
    %861 = vmatpush1.bf16.msra.mxu0 0
    %862 = vmatprep.subr.bf16.mxu0 0
    %863 = vmatpush1.bf16.msra.mxu0 0
    %864 = vmatprep.mubr.bf16.mxu0 0
    %865 = vmatmul.mubr.bf16.gmra.mrb[0].mxu0 %v789
    %v866 = vpop.f32.mrb[0].mxu0
    %v867 = vadd.f32 %v782, %v866
    %v868 = vpop.f32.mrb[0].mxu0
    %v869 = vadd.f32 %v784, %v868
    %v870 = vpop.f32.mrb[0].mxu0
    %v871 = vpop.f32.mrb[0].mxu0
    %872 = vdwg.mxu0
    %v873 = vadd.f32 %v826, %v97
    %v874 = vadd.f32 %v828, %v101
    %v875 = vadd.f32 %v867, %v105
    %v876 = vadd.f32 %v869, %v109
    %v877 = vxor.u32 %v873, 2147483648
    %v878 = vmul.f32 %v877, 1.442695
    %v879 = vpow.pop %v878
    %v880 = vadd.f32 %v879, 1.0
    %v881 = vrcp.pop %v880
    %v882 = vmul.f32 1.0, %v881
    %v883 = vxor.u32 %v874, 2147483648
    %v884 = vmul.f32 %v883, 1.442695
    %v885 = vpow.pop %v884
    %v886 = vadd.f32 %v885, 1.0
    %v887 = vrcp.pop %v886
    %v888 = vmul.f32 1.0, %v887
    %v889 = vtanh.pop %v875
    %v890 = vxor.u32 %v876, 2147483648
    %v891 = vmul.f32 %v890, 1.442695
    %v892 = vpow.pop %v891
    %v893 = vadd.f32 %v892, 1.0
    %v894 = vrcp.pop %v893
    %v895 = vmul.f32 1.0, %v894
    %v896 = vmul.f32 %v888, %v700
    %v897 = vmul.f32 %v882, %v889
    %v898 = vadd.f32 %v896, %v897
    %v899 = vtanh.pop %v898
    %v900 = vmul.f32 %v895, %v899
    %s901 = scalar_lea.vmem %s0, 12
    %v902 = vld [vmem:[%s901] sm:$0xf]
    %v903 = vpack.c.bf16 %v900, %v900
    %904 = vmatprep.subr.bf16.mxu0 %v215
    %905 = vmatpush1.bf16.msra.mxu0 %v214
    %906 = vmatprep.subr.bf16.mxu0 %v219
    %907 = vmatpush1.bf16.msra.mxu0 %v218
    %908 = vmatprep.subr.bf16.mxu0 %v223
    %909 = vmatpush1.bf16.msra.mxu0 %v222
    %910 = vmatprep.subr.bf16.mxu0 %v227
    %911 = vmatpush1.bf16.msra.mxu0 %v226
    %912 = vmatprep.subr.bf16.mxu0 %v231
    %913 = vmatpush1.bf16.msra.mxu0 %v230
    %914 = vmatprep.subr.bf16.mxu0 %v235
    %915 = vmatpush1.bf16.msra.mxu0 %v234
    %916 = vmatprep.subr.bf16.mxu0 %v239
    %917 = vmatpush1.bf16.msra.mxu0 %v238
    %918 = vmatprep.subr.bf16.mxu0 %v243
    %919 = vmatpush1.bf16.msra.mxu0 %v242
    %920 = vmatprep.subr.bf16.mxu0 0
    %921 = vmatpush1.bf16.msra.mxu0 0
    %922 = vmatprep.subr.bf16.mxu0 0
    %923 = vmatpush1.bf16.msra.mxu0 0
    %924 = vmatprep.subr.bf16.mxu0 0
    %925 = vmatpush1.bf16.msra.mxu0 0
    %926 = vmatprep.subr.bf16.mxu0 0
    %927 = vmatpush1.bf16.msra.mxu0 0
    %928 = vmatprep.subr.bf16.mxu0 0
    %929 = vmatpush1.bf16.msra.mxu0 0
    %930 = vmatprep.subr.bf16.mxu0 0
    %931 = vmatpush1.bf16.msra.mxu0 0
    %932 = vmatprep.subr.bf16.mxu0 0
    %933 = vmatpush1.bf16.msra.mxu0 0
    %934 = vmatprep.subr.bf16.mxu0 0
    %935 = vmatpush1.bf16.msra.mxu0 0
    %936 = vmatprep.mubr.bf16.mxu0 0
    %937 = vmatmul.mubr.bf16.gmra.mrb[0].mxu0 %v903
    %v938 = vpop.f32.mrb[0].mxu0
    %v939 = vadd.f32 0.0, %v938
    %v940 = vpop.f32.mrb[0].mxu0
    %v941 = vadd.f32 0.0, %v940
    %v942 = vpop.f32.mrb[0].mxu0
    %v943 = vpop.f32.mrb[0].mxu0
    %944 = vdwg.mxu0
    %945 = vmatprep.subr.bf16.mxu0 %v217
    %946 = vmatpush1.bf16.msra.mxu0 %v216
    %947 = vmatprep.subr.bf16.mxu0 %v221
    %948 = vmatpush1.bf16.msra.mxu0 %v220
    %949 = vmatprep.subr.bf16.mxu0 %v225
    %950 = vmatpush1.bf16.msra.mxu0 %v224
    %951 = vmatprep.subr.bf16.mxu0 %v229
    %952 = vmatpush1.bf16.msra.mxu0 %v228
    %953 = vmatprep.subr.bf16.mxu0 %v233
    %954 = vmatpush1.bf16.msra.mxu0 %v232
    %955 = vmatprep.subr.bf16.mxu0 %v237
    %956 = vmatpush1.bf16.msra.mxu0 %v236
    %957 = vmatprep.subr.bf16.mxu0 %v241
    %958 = vmatpush1.bf16.msra.mxu0 %v240
    %959 = vmatprep.subr.bf16.mxu0 %v245
    %960 = vmatpush1.bf16.msra.mxu0 %v244
    %961 = vmatprep.subr.bf16.mxu0 0
    %962 = vmatpush1.bf16.msra.mxu0 0
    %963 = vmatprep.subr.bf16.mxu0 0
    %964 = vmatpush1.bf16.msra.mxu0 0
    %965 = vmatprep.subr.bf16.mxu0 0
    %966 = vmatpush1.bf16.msra.mxu0 0
    %967 = vmatprep.subr.bf16.mxu0 0
    %968 = vmatpush1.bf16.msra.mxu0 0
    %969 = vmatprep.subr.bf16.mxu0 0
    %970 = vmatpush1.bf16.msra.mxu0 0
    %971 = vmatprep.subr.bf16.mxu0 0
    %972 = vmatpush1.bf16.msra.mxu0 0
    %973 = vmatprep.subr.bf16.mxu0 0
    %974 = vmatpush1.bf16.msra.mxu0 0
    %975 = vmatprep.subr.bf16.mxu0 0
    %976 = vmatpush1.bf16.msra.mxu0 0
    %977 = vmatprep.mubr.bf16.mxu0 0
    %978 = vmatmul.mubr.bf16.gmra.mrb[0].mxu0 %v903
    %v979 = vpop.f32.mrb[0].mxu0
    %v980 = vadd.f32 0.0, %v979
    %v981 = vpop.f32.mrb[0].mxu0
    %v982 = vadd.f32 0.0, %v981
    %v983 = vpop.f32.mrb[0].mxu0
    %v984 = vpop.f32.mrb[0].mxu0
    %985 = vdwg.mxu0
    %v987 = vsel %vm378, %v902, 0
    %989 = vmatprep.subr.bf16.mxu0 %v387
    %990 = vmatpush1.bf16.msra.mxu0 %v384
    %991 = vmatprep.subr.bf16.mxu0 0
    %992 = vmatpush1.bf16.msra.mxu0 0
    %993 = vmatprep.subr.bf16.mxu0 0
    %994 = vmatpush1.bf16.msra.mxu0 0
    %995 = vmatprep.subr.bf16.mxu0 0
    %996 = vmatpush1.bf16.msra.mxu0 0
    %997 = vmatprep.subr.bf16.mxu0 0
    %998 = vmatpush1.bf16.msra.mxu0 0
    %999 = vmatprep.subr.bf16.mxu0 0
    %1000 = vmatpush1.bf16.msra.mxu0 0
    %1001 = vmatprep.subr.bf16.mxu0 0
    %1002 = vmatpush1.bf16.msra.mxu0 0
    %1003 = vmatprep.subr.bf16.mxu0 0
    %1004 = vmatpush1.bf16.msra.mxu0 0
    %1005 = vmatprep.subr.bf16.mxu0 0
    %1006 = vmatpush1.bf16.msra.mxu0 0
    %1007 = vmatprep.subr.bf16.mxu0 0
    %1008 = vmatpush1.bf16.msra.mxu0 0
    %1009 = vmatprep.subr.bf16.mxu0 0
    %1010 = vmatpush1.bf16.msra.mxu0 0
    %1011 = vmatprep.subr.bf16.mxu0 0
    %1012 = vmatpush1.bf16.msra.mxu0 0
    %1013 = vmatprep.subr.bf16.mxu0 0
    %1014 = vmatpush1.bf16.msra.mxu0 0
    %1015 = vmatprep.subr.bf16.mxu0 0
    %1016 = vmatpush1.bf16.msra.mxu0 0
    %1017 = vmatprep.subr.bf16.mxu0 0
    %1018 = vmatpush1.bf16.msra.mxu0 0
    %1019 = vmatprep.subr.bf16.mxu0 0
    %1020 = vmatpush1.bf16.msra.mxu0 0
    %1021 = vmatprep.mubr.bf16.mxu0 0
    %1022 = vmatmul.mubr.bf16.gmra.mrb[0].mxu0 %v987
    %v1023 = vpop.f32.mrb[0].mxu0
    %v1024 = vadd.f32 %v939, %v1023
    %v1025 = vpop.f32.mrb[0].mxu0
    %v1026 = vadd.f32 %v941, %v1025
    %v1027 = vpop.f32.mrb[0].mxu0
    %v1028 = vpop.f32.mrb[0].mxu0
    %1029 = vdwg.mxu0
    %1030 = vmatprep.subr.bf16.mxu0 %v393
    %1031 = vmatpush1.bf16.msra.mxu0 %v390
    %1032 = vmatprep.subr.bf16.mxu0 0
    %1033 = vmatpush1.bf16.msra.mxu0 0
    %1034 = vmatprep.subr.bf16.mxu0 0
    %1035 = vmatpush1.bf16.msra.mxu0 0
    %1036 = vmatprep.subr.bf16.mxu0 0
    %1037 = vmatpush1.bf16.msra.mxu0 0
    %1038 = vmatprep.subr.bf16.mxu0 0
    %1039 = vmatpush1.bf16.msra.mxu0 0
    %1040 = vmatprep.subr.bf16.mxu0 0
    %1041 = vmatpush1.bf16.msra.mxu0 0
    %1042 = vmatprep.subr.bf16.mxu0 0
    %1043 = vmatpush1.bf16.msra.mxu0 0
    %1044 = vmatprep.subr.bf16.mxu0 0
    %1045 = vmatpush1.bf16.msra.mxu0 0
    %1046 = vmatprep.subr.bf16.mxu0 0
    %1047 = vmatpush1.bf16.msra.mxu0 0
    %1048 = vmatprep.subr.bf16.mxu0 0
    %1049 = vmatpush1.bf16.msra.mxu0 0
    %1050 = vmatprep.subr.bf16.mxu0 0
    %1051 = vmatpush1.bf16.msra.mxu0 0
    %1052 = vmatprep.subr.bf16.mxu0 0
    %1053 = vmatpush1.bf16.msra.mxu0 0
    %1054 = vmatprep.subr.bf16.mxu0 0
    %1055 = vmatpush1.bf16.msra.mxu0 0
    %1056 = vmatprep.subr.bf16.mxu0 0
    %1057 = vmatpush1.bf16.msra.mxu0 0
    %1058 = vmatprep.subr.bf16.mxu0 0
    %1059 = vmatpush1.bf16.msra.mxu0 0
    %1060 = vmatprep.subr.bf16.mxu0 0
    %1061 = vmatpush1.bf16.msra.mxu0 0
    %1062 = vmatprep.mubr.bf16.mxu0 0
    %1063 = vmatmul.mubr.bf16.gmra.mrb[0].mxu0 %v987
    %v1064 = vpop.f32.mrb[0].mxu0
    %v1065 = vadd.f32 %v980, %v1064
    %v1066 = vpop.f32.mrb[0].mxu0
    %v1067 = vadd.f32 %v982, %v1066
    %v1068 = vpop.f32.mrb[0].mxu0
    %v1069 = vpop.f32.mrb[0].mxu0
    %1070 = vdwg.mxu0
    %v1071 = vadd.f32 %v1024, %v97
    %v1072 = vadd.f32 %v1026, %v101
    %v1073 = vadd.f32 %v1065, %v105
    %v1074 = vadd.f32 %v1067, %v109
    %v1075 = vxor.u32 %v1071, 2147483648
    %v1076 = vmul.f32 %v1075, 1.442695
    %v1077 = vpow.pop %v1076
    %v1078 = vadd.f32 %v1077, 1.0
    %v1079 = vrcp.pop %v1078
    %v1080 = vmul.f32 1.0, %v1079
    %v1081 = vxor.u32 %v1072, 2147483648
    %v1082 = vmul.f32 %v1081, 1.442695
    %v1083 = vpow.pop %v1082
    %v1084 = vadd.f32 %v1083, 1.0
    %v1085 = vrcp.pop %v1084
    %v1086 = vmul.f32 1.0, %v1085
    %v1087 = vtanh.pop %v1073
    %v1088 = vxor.u32 %v1074, 2147483648
    %v1089 = vmul.f32 %v1088, 1.442695
    %v1090 = vpow.pop %v1089
    %v1091 = vadd.f32 %v1090, 1.0
    %v1092 = vrcp.pop %v1091
    %v1093 = vmul.f32 1.0, %v1092
    %v1094 = vmul.f32 %v1086, %v898
    %v1095 = vmul.f32 %v1080, %v1087
    %v1096 = vadd.f32 %v1094, %v1095
    %v1097 = vtanh.pop %v1096
    %v1098 = vmul.f32 %v1093, %v1097
    %s1099 = scalar_lea.vmem %s0, 16
    %v1100 = vld [vmem:[%s1099] sm:$0xf]
    %v1101 = vpack.c.bf16 %v1098, %v1098
    %1102 = vmatprep.subr.bf16.mxu0 %v215
    %1103 = vmatpush1.bf16.msra.mxu0 %v214
    %1104 = vmatprep.subr.bf16.mxu0 %v219
    %1105 = vmatpush1.bf16.msra.mxu0 %v218
    %1106 = vmatprep.subr.bf16.mxu0 %v223
    %1107 = vmatpush1.bf16.msra.mxu0 %v222
    %1108 = vmatprep.subr.bf16.mxu0 %v227
    %1109 = vmatpush1.bf16.msra.mxu0 %v226
    %1110 = vmatprep.subr.bf16.mxu0 %v231
    %1111 = vmatpush1.bf16.msra.mxu0 %v230
    %1112 = vmatprep.subr.bf16.mxu0 %v235
    %1113 = vmatpush1.bf16.msra.mxu0 %v234
    %1114 = vmatprep.subr.bf16.mxu0 %v239
    %1115 = vmatpush1.bf16.msra.mxu0 %v238
    %1116 = vmatprep.subr.bf16.mxu0 %v243
    %1117 = vmatpush1.bf16.msra.mxu0 %v242
    %1118 = vmatprep.subr.bf16.mxu0 0
    %1119 = vmatpush1.bf16.msra.mxu0 0
    %1120 = vmatprep.subr.bf16.mxu0 0
    %1121 = vmatpush1.bf16.msra.mxu0 0
    %1122 = vmatprep.subr.bf16.mxu0 0
    %1123 = vmatpush1.bf16.msra.mxu0 0
    %1124 = vmatprep.subr.bf16.mxu0 0
    %1125 = vmatpush1.bf16.msra.mxu0 0
    %1126 = vmatprep.subr.bf16.mxu0 0
    %1127 = vmatpush1.bf16.msra.mxu0 0
    %1128 = vmatprep.subr.bf16.mxu0 0
    %1129 = vmatpush1.bf16.msra.mxu0 0
    %1130 = vmatprep.subr.bf16.mxu0 0
    %1131 = vmatpush1.bf16.msra.mxu0 0
    %1132 = vmatprep.subr.bf16.mxu0 0
    %1133 = vmatpush1.bf16.msra.mxu0 0
    %1134 = vmatprep.mubr.bf16.mxu0 0
    %1135 = vmatmul.mubr.bf16.gmra.mrb[0].mxu0 %v1101
    %v1136 = vpop.f32.mrb[0].mxu0
    %v1137 = vadd.f32 0.0, %v1136
    %v1138 = vpop.f32.mrb[0].mxu0
    %v1139 = vadd.f32 0.0, %v1138
    %v1140 = vpop.f32.mrb[0].mxu0
    %v1141 = vpop.f32.mrb[0].mxu0
    %1142 = vdwg.mxu0
    %1143 = vmatprep.subr.bf16.mxu0 %v217
    %1144 = vmatpush1.bf16.msra.mxu0 %v216
    %1145 = vmatprep.subr.bf16.mxu0 %v221
    %1146 = vmatpush1.bf16.msra.mxu0 %v220
    %1147 = vmatprep.subr.bf16.mxu0 %v225
    %1148 = vmatpush1.bf16.msra.mxu0 %v224
    %1149 = vmatprep.subr.bf16.mxu0 %v229
    %1150 = vmatpush1.bf16.msra.mxu0 %v228
    %1151 = vmatprep.subr.bf16.mxu0 %v233
    %1152 = vmatpush1.bf16.msra.mxu0 %v232
    %1153 = vmatprep.subr.bf16.mxu0 %v237
    %1154 = vmatpush1.bf16.msra.mxu0 %v236
    %1155 = vmatprep.subr.bf16.mxu0 %v241
    %1156 = vmatpush1.bf16.msra.mxu0 %v240
    %1157 = vmatprep.subr.bf16.mxu0 %v245
    %1158 = vmatpush1.bf16.msra.mxu0 %v244
    %1159 = vmatprep.subr.bf16.mxu0 0
    %1160 = vmatpush1.bf16.msra.mxu0 0
    %1161 = vmatprep.subr.bf16.mxu0 0
    %1162 = vmatpush1.bf16.msra.mxu0 0
    %1163 = vmatprep.subr.bf16.mxu0 0
    %1164 = vmatpush1.bf16.msra.mxu0 0
    %1165 = vmatprep.subr.bf16.mxu0 0
    %1166 = vmatpush1.bf16.msra.mxu0 0
    %1167 = vmatprep.subr.bf16.mxu0 0
    %1168 = vmatpush1.bf16.msra.mxu0 0
    %1169 = vmatprep.subr.bf16.mxu0 0
    %1170 = vmatpush1.bf16.msra.mxu0 0
    %1171 = vmatprep.subr.bf16.mxu0 0
    %1172 = vmatpush1.bf16.msra.mxu0 0
    %1173 = vmatprep.subr.bf16.mxu0 0
    %1174 = vmatpush1.bf16.msra.mxu0 0
    %1175 = vmatprep.mubr.bf16.mxu0 0
    %1176 = vmatmul.mubr.bf16.gmra.mrb[0].mxu0 %v1101
    %v1177 = vpop.f32.mrb[0].mxu0
    %v1178 = vadd.f32 0.0, %v1177
    %v1179 = vpop.f32.mrb[0].mxu0
    %v1180 = vadd.f32 0.0, %v1179
    %v1181 = vpop.f32.mrb[0].mxu0
    %v1182 = vpop.f32.mrb[0].mxu0
    %1183 = vdwg.mxu0
    %v1185 = vsel %vm378, %v1100, 0
    %1187 = vmatprep.subr.bf16.mxu0 %v387
    %1188 = vmatpush1.bf16.msra.mxu0 %v384
    %1189 = vmatprep.subr.bf16.mxu0 0
    %1190 = vmatpush1.bf16.msra.mxu0 0
    %1191 = vmatprep.subr.bf16.mxu0 0
    %1192 = vmatpush1.bf16.msra.mxu0 0
    %1193 = vmatprep.subr.bf16.mxu0 0
    %1194 = vmatpush1.bf16.msra.mxu0 0
    %1195 = vmatprep.subr.bf16.mxu0 0
    %1196 = vmatpush1.bf16.msra.mxu0 0
    %1197 = vmatprep.subr.bf16.mxu0 0
    %1198 = vmatpush1.bf16.msra.mxu0 0
    %1199 = vmatprep.subr.bf16.mxu0 0
    %1200 = vmatpush1.bf16.msra.mxu0 0
    %1201 = vmatprep.subr.bf16.mxu0 0
    %1202 = vmatpush1.bf16.msra.mxu0 0
    %1203 = vmatprep.subr.bf16.mxu0 0
    %1204 = vmatpush1.bf16.msra.mxu0 0
    %1205 = vmatprep.subr.bf16.mxu0 0
    %1206 = vmatpush1.bf16.msra.mxu0 0
    %1207 = vmatprep.subr.bf16.mxu0 0
    %1208 = vmatpush1.bf16.msra.mxu0 0
    %1209 = vmatprep.subr.bf16.mxu0 0
    %1210 = vmatpush1.bf16.msra.mxu0 0
    %1211 = vmatprep.subr.bf16.mxu0 0
    %1212 = vmatpush1.bf16.msra.mxu0 0
    %1213 = vmatprep.subr.bf16.mxu0 0
    %1214 = vmatpush1.bf16.msra.mxu0 0
    %1215 = vmatprep.subr.bf16.mxu0 0
    %1216 = vmatpush1.bf16.msra.mxu0 0
    %1217 = vmatprep.subr.bf16.mxu0 0
    %1218 = vmatpush1.bf16.msra.mxu0 0
    %1219 = vmatprep.mubr.bf16.mxu0 0
    %1220 = vmatmul.mubr.bf16.gmra.mrb[0].mxu0 %v1185
    %v1221 = vpop.f32.mrb[0].mxu0
    %v1222 = vadd.f32 %v1137, %v1221
    %v1223 = vpop.f32.mrb[0].mxu0
    %v1224 = vadd.f32 %v1139, %v1223
    %v1225 = vpop.f32.mrb[0].mxu0
    %v1226 = vpop.f32.mrb[0].mxu0
    %1227 = vdwg.mxu0
    %1228 = vmatprep.subr.bf16.mxu0 %v393
    %1229 = vmatpush1.bf16.msra.mxu0 %v390
    %1230 = vmatprep.subr.bf16.mxu0 0
    %1231 = vmatpush1.bf16.msra.mxu0 0
    %1232 = vmatprep.subr.bf16.mxu0 0
    %1233 = vmatpush1.bf16.msra.mxu0 0
    %1234 = vmatprep.subr.bf16.mxu0 0
    %1235 = vmatpush1.bf16.msra.mxu0 0
    %1236 = vmatprep.subr.bf16.mxu0 0
    %1237 = vmatpush1.bf16.msra.mxu0 0
    %1238 = vmatprep.subr.bf16.mxu0 0
    %1239 = vmatpush1.bf16.msra.mxu0 0
    %1240 = vmatprep.subr.bf16.mxu0 0
    %1241 = vmatpush1.bf16.msra.mxu0 0
    %1242 = vmatprep.subr.bf16.mxu0 0
    %1243 = vmatpush1.bf16.msra.mxu0 0
    %1244 = vmatprep.subr.bf16.mxu0 0
    %1245 = vmatpush1.bf16.msra.mxu0 0
    %1246 = vmatprep.subr.bf16.mxu0 0
    %1247 = vmatpush1.bf16.msra.mxu0 0
    %1248 = vmatprep.subr.bf16.mxu0 0
    %1249 = vmatpush1.bf16.msra.mxu0 0
    %1250 = vmatprep.subr.bf16.mxu0 0
    %1251 = vmatpush1.bf16.msra.mxu0 0
    %1252 = vmatprep.subr.bf16.mxu0 0
    %1253 = vmatpush1.bf16.msra.mxu0 0
    %1254 = vmatprep.subr.bf16.mxu0 0
    %1255 = vmatpush1.bf16.msra.mxu0 0
    %1256 = vmatprep.subr.bf16.mxu0 0
    %1257 = vmatpush1.bf16.msra.mxu0 0
    %1258 = vmatprep.subr.bf16.mxu0 0
    %1259 = vmatpush1.bf16.msra.mxu0 0
    %1260 = vmatprep.mubr.bf16.mxu0 0
    %1261 = vmatmul.mubr.bf16.gmra.mrb[0].mxu0 %v1185
    %v1262 = vpop.f32.mrb[0].mxu0
    %v1263 = vadd.f32 %v1178, %v1262
    %v1264 = vpop.f32.mrb[0].mxu0
    %v1265 = vadd.f32 %v1180, %v1264
    %v1266 = vpop.f32.mrb[0].mxu0
    %v1267 = vpop.f32.mrb[0].mxu0
    %1268 = vdwg.mxu0
    %v1269 = vadd.f32 %v1222, %v97
    %v1270 = vadd.f32 %v1224, %v101
    %v1271 = vadd.f32 %v1263, %v105
    %v1272 = vadd.f32 %v1265, %v109
    %v1273 = vxor.u32 %v1269, 2147483648
    %v1274 = vmul.f32 %v1273, 1.442695
    %v1275 = vpow.pop %v1274
    %v1276 = vadd.f32 %v1275, 1.0
    %v1277 = vrcp.pop %v1276
    %v1278 = vmul.f32 1.0, %v1277
    %v1279 = vxor.u32 %v1270, 2147483648
    %v1280 = vmul.f32 %v1279, 1.442695
    %v1281 = vpow.pop %v1280
    %v1282 = vadd.f32 %v1281, 1.0
    %v1283 = vrcp.pop %v1282
    %v1284 = vmul.f32 1.0, %v1283
    %v1285 = vtanh.pop %v1271
    %v1286 = vxor.u32 %v1272, 2147483648
    %v1287 = vmul.f32 %v1286, 1.442695
    %v1288 = vpow.pop %v1287
    %v1289 = vadd.f32 %v1288, 1.0
    %v1290 = vrcp.pop %v1289
    %v1291 = vmul.f32 1.0, %v1290
    %v1292 = vmul.f32 %v1284, %v1096
    %v1293 = vmul.f32 %v1278, %v1285
    %v1294 = vadd.f32 %v1292, %v1293
    %v1295 = vtanh.pop %v1294
    %v1296 = vmul.f32 %v1291, %v1295
    %s1297 = scalar_lea.vmem %s0, 20
    %v1298 = vld [vmem:[%s1297] sm:$0xf]
    %v1299 = vpack.c.bf16 %v1296, %v1296
    %1300 = vmatprep.subr.bf16.mxu0 %v215
    %1301 = vmatpush1.bf16.msra.mxu0 %v214
    %1302 = vmatprep.subr.bf16.mxu0 %v219
    %1303 = vmatpush1.bf16.msra.mxu0 %v218
    %1304 = vmatprep.subr.bf16.mxu0 %v223
    %1305 = vmatpush1.bf16.msra.mxu0 %v222
    %1306 = vmatprep.subr.bf16.mxu0 %v227
    %1307 = vmatpush1.bf16.msra.mxu0 %v226
    %1308 = vmatprep.subr.bf16.mxu0 %v231
    %1309 = vmatpush1.bf16.msra.mxu0 %v230
    %1310 = vmatprep.subr.bf16.mxu0 %v235
    %1311 = vmatpush1.bf16.msra.mxu0 %v234
    %1312 = vmatprep.subr.bf16.mxu0 %v239
    %1313 = vmatpush1.bf16.msra.mxu0 %v238
    %1314 = vmatprep.subr.bf16.mxu0 %v243
    %1315 = vmatpush1.bf16.msra.mxu0 %v242
    %1316 = vmatprep.subr.bf16.mxu0 0
    %1317 = vmatpush1.bf16.msra.mxu0 0
    %1318 = vmatprep.subr.bf16.mxu0 0
    %1319 = vmatpush1.bf16.msra.mxu0 0
    %1320 = vmatprep.subr.bf16.mxu0 0
    %1321 = vmatpush1.bf16.msra.mxu0 0
    %1322 = vmatprep.subr.bf16.mxu0 0
    %1323 = vmatpush1.bf16.msra.mxu0 0
    %1324 = vmatprep.subr.bf16.mxu0 0
    %1325 = vmatpush1.bf16.msra.mxu0 0
    %1326 = vmatprep.subr.bf16.mxu0 0
    %1327 = vmatpush1.bf16.msra.mxu0 0
    %1328 = vmatprep.subr.bf16.mxu0 0
    %1329 = vmatpush1.bf16.msra.mxu0 0
    %1330 = vmatprep.subr.bf16.mxu0 0
    %1331 = vmatpush1.bf16.msra.mxu0 0
    %1332 = vmatprep.mubr.bf16.mxu0 0
    %1333 = vmatmul.mubr.bf16.gmra.mrb[0].mxu0 %v1299
    %v1334 = vpop.f32.mrb[0].mxu0
    %v1335 = vadd.f32 0.0, %v1334
    %v1336 = vpop.f32.mrb[0].mxu0
    %v1337 = vadd.f32 0.0, %v1336
    %v1338 = vpop.f32.mrb[0].mxu0
    %v1339 = vpop.f32.mrb[0].mxu0
    %1340 = vdwg.mxu0
    %1341 = vmatprep.subr.bf16.mxu0 %v217
    %1342 = vmatpush1.bf16.msra.mxu0 %v216
    %1343 = vmatprep.subr.bf16.mxu0 %v221
    %1344 = vmatpush1.bf16.msra.mxu0 %v220
    %1345 = vmatprep.subr.bf16.mxu0 %v225
    %1346 = vmatpush1.bf16.msra.mxu0 %v224
    %1347 = vmatprep.subr.bf16.mxu0 %v229
    %1348 = vmatpush1.bf16.msra.mxu0 %v228
    %1349 = vmatprep.subr.bf16.mxu0 %v233
    %1350 = vmatpush1.bf16.msra.mxu0 %v232
    %1351 = vmatprep.subr.bf16.mxu0 %v237
    %1352 = vmatpush1.bf16.msra.mxu0 %v236
    %1353 = vmatprep.subr.bf16.mxu0 %v241
    %1354 = vmatpush1.bf16.msra.mxu0 %v240
    %1355 = vmatprep.subr.bf16.mxu0 %v245
    %1356 = vmatpush1.bf16.msra.mxu0 %v244
    %1357 = vmatprep.subr.bf16.mxu0 0
    %1358 = vmatpush1.bf16.msra.mxu0 0
    %1359 = vmatprep.subr.bf16.mxu0 0
    %1360 = vmatpush1.bf16.msra.mxu0 0
    %1361 = vmatprep.subr.bf16.mxu0 0
    %1362 = vmatpush1.bf16.msra.mxu0 0
    %1363 = vmatprep.subr.bf16.mxu0 0
    %1364 = vmatpush1.bf16.msra.mxu0 0
    %1365 = vmatprep.subr.bf16.mxu0 0
    %1366 = vmatpush1.bf16.msra.mxu0 0
    %1367 = vmatprep.subr.bf16.mxu0 0
    %1368 = vmatpush1.bf16.msra.mxu0 0
    %1369 = vmatprep.subr.bf16.mxu0 0
    %1370 = vmatpush1.bf16.msra.mxu0 0
    %1371 = vmatprep.subr.bf16.mxu0 0
    %1372 = vmatpush1.bf16.msra.mxu0 0
    %1373 = vmatprep.mubr.bf16.mxu0 0
    %1374 = vmatmul.mubr.bf16.gmra.mrb[0].mxu0 %v1299
    %v1375 = vpop.f32.mrb[0].mxu0
    %v1376 = vadd.f32 0.0, %v1375
    %v1377 = vpop.f32.mrb[0].mxu0
    %v1378 = vadd.f32 0.0, %v1377
    %v1379 = vpop.f32.mrb[0].mxu0
    %v1380 = vpop.f32.mrb[0].mxu0
    %1381 = vdwg.mxu0
    %v1383 = vsel %vm378, %v1298, 0
    %1385 = vmatprep.subr.bf16.mxu0 %v387
    %1386 = vmatpush1.bf16.msra.mxu0 %v384
    %1387 = vmatprep.subr.bf16.mxu0 0
    %1388 = vmatpush1.bf16.msra.mxu0 0
    %1389 = vmatprep.subr.bf16.mxu0 0
    %1390 = vmatpush1.bf16.msra.mxu0 0
    %1391 = vmatprep.subr.bf16.mxu0 0
    %1392 = vmatpush1.bf16.msra.mxu0 0
    %1393 = vmatprep.subr.bf16.mxu0 0
    %1394 = vmatpush1.bf16.msra.mxu0 0
    %1395 = vmatprep.subr.bf16.mxu0 0
    %1396 = vmatpush1.bf16.msra.mxu0 0
    %1397 = vmatprep.subr.bf16.mxu0 0
    %1398 = vmatpush1.bf16.msra.mxu0 0
    %1399 = vmatprep.subr.bf16.mxu0 0
    %1400 = vmatpush1.bf16.msra.mxu0 0
    %1401 = vmatprep.subr.bf16.mxu0 0
    %1402 = vmatpush1.bf16.msra.mxu0 0
    %1403 = vmatprep.subr.bf16.mxu0 0
    %1404 = vmatpush1.bf16.msra.mxu0 0
    %1405 = vmatprep.subr.bf16.mxu0 0
    %1406 = vmatpush1.bf16.msra.mxu0 0
    %1407 = vmatprep.subr.bf16.mxu0 0
    %1408 = vmatpush1.bf16.msra.mxu0 0
    %1409 = vmatprep.subr.bf16.mxu0 0
    %1410 = vmatpush1.bf16.msra.mxu0 0
    %1411 = vmatprep.subr.bf16.mxu0 0
    %1412 = vmatpush1.bf16.msra.mxu0 0
    %1413 = vmatprep.subr.bf16.mxu0 0
    %1414 = vmatpush1.bf16.msra.mxu0 0
    %1415 = vmatprep.subr.bf16.mxu0 0
    %1416 = vmatpush1.bf16.msra.mxu0 0
    %1417 = vmatprep.mubr.bf16.mxu0 0
    %1418 = vmatmul.mubr.bf16.gmra.mrb[0].mxu0 %v1383
    %v1419 = vpop.f32.mrb[0].mxu0
    %v1420 = vadd.f32 %v1335, %v1419
    %v1421 = vpop.f32.mrb[0].mxu0
    %v1422 = vadd.f32 %v1337, %v1421
    %v1423 = vpop.f32.mrb[0].mxu0
    %v1424 = vpop.f32.mrb[0].mxu0
    %1425 = vdwg.mxu0
    %1426 = vmatprep.subr.bf16.mxu0 %v393
    %1427 = vmatpush1.bf16.msra.mxu0 %v390
    %1428 = vmatprep.subr.bf16.mxu0 0
    %1429 = vmatpush1.bf16.msra.mxu0 0
    %1430 = vmatprep.subr.bf16.mxu0 0
    %1431 = vmatpush1.bf16.msra.mxu0 0
    %1432 = vmatprep.subr.bf16.mxu0 0
    %1433 = vmatpush1.bf16.msra.mxu0 0
    %1434 = vmatprep.subr.bf16.mxu0 0
    %1435 = vmatpush1.bf16.msra.mxu0 0
    %1436 = vmatprep.subr.bf16.mxu0 0
    %1437 = vmatpush1.bf16.msra.mxu0 0
    %1438 = vmatprep.subr.bf16.mxu0 0
    %1439 = vmatpush1.bf16.msra.mxu0 0
    %1440 = vmatprep.subr.bf16.mxu0 0
    %1441 = vmatpush1.bf16.msra.mxu0 0
    %1442 = vmatprep.subr.bf16.mxu0 0
    %1443 = vmatpush1.bf16.msra.mxu0 0
    %1444 = vmatprep.subr.bf16.mxu0 0
    %1445 = vmatpush1.bf16.msra.mxu0 0
    %1446 = vmatprep.subr.bf16.mxu0 0
    %1447 = vmatpush1.bf16.msra.mxu0 0
    %1448 = vmatprep.subr.bf16.mxu0 0
    %1449 = vmatpush1.bf16.msra.mxu0 0
    %1450 = vmatprep.subr.bf16.mxu0 0
    %1451 = vmatpush1.bf16.msra.mxu0 0
    %1452 = vmatprep.subr.bf16.mxu0 0
    %1453 = vmatpush1.bf16.msra.mxu0 0
    %1454 = vmatprep.subr.bf16.mxu0 0
    %1455 = vmatpush1.bf16.msra.mxu0 0
    %1456 = vmatprep.subr.bf16.mxu0 0
    %1457 = vmatpush1.bf16.msra.mxu0 0
    %1458 = vmatprep.mubr.bf16.mxu0 0
    %1459 = vmatmul.mubr.bf16.gmra.mrb[0].mxu0 %v1383
    %v1460 = vpop.f32.mrb[0].mxu0
    %v1461 = vadd.f32 %v1376, %v1460
    %v1462 = vpop.f32.mrb[0].mxu0
    %v1463 = vadd.f32 %v1378, %v1462
    %v1464 = vpop.f32.mrb[0].mxu0
    %v1465 = vpop.f32.mrb[0].mxu0
    %1466 = vdwg.mxu0
    %v1467 = vadd.f32 %v1420, %v97
    %v1468 = vadd.f32 %v1422, %v101
    %v1469 = vadd.f32 %v1461, %v105
    %v1470 = vadd.f32 %v1463, %v109
    %v1471 = vxor.u32 %v1467, 2147483648
    %v1472 = vmul.f32 %v1471, 1.442695
    %v1473 = vpow.pop %v1472
    %v1474 = vadd.f32 %v1473, 1.0
    %v1475 = vrcp.pop %v1474
    %v1476 = vmul.f32 1.0, %v1475
    %v1477 = vxor.u32 %v1468, 2147483648
    %v1478 = vmul.f32 %v1477, 1.442695
    %v1479 = vpow.pop %v1478
    %v1480 = vadd.f32 %v1479, 1.0
    %v1481 = vrcp.pop %v1480
    %v1482 = vmul.f32 1.0, %v1481
    %v1483 = vtanh.pop %v1469
    %v1484 = vxor.u32 %v1470, 2147483648
    %v1485 = vmul.f32 %v1484, 1.442695
    %v1486 = vpow.pop %v1485
    %v1487 = vadd.f32 %v1486, 1.0
    %v1488 = vrcp.pop %v1487
    %v1489 = vmul.f32 1.0, %v1488
    %v1490 = vmul.f32 %v1482, %v1294
    %v1491 = vmul.f32 %v1476, %v1483
    %v1492 = vadd.f32 %v1490, %v1491
    %v1493 = vtanh.pop %v1492
    %v1494 = vmul.f32 %v1489, %v1493
    %s1495 = scalar_lea.vmem %s0, 24
    %v1496 = vld [vmem:[%s1495] sm:$0xf]
    %v1497 = vpack.c.bf16 %v1494, %v1494
    %1498 = vmatprep.subr.bf16.mxu0 %v215
    %1499 = vmatpush1.bf16.msra.mxu0 %v214
    %1500 = vmatprep.subr.bf16.mxu0 %v219
    %1501 = vmatpush1.bf16.msra.mxu0 %v218
    %1502 = vmatprep.subr.bf16.mxu0 %v223
    %1503 = vmatpush1.bf16.msra.mxu0 %v222
    %1504 = vmatprep.subr.bf16.mxu0 %v227
    %1505 = vmatpush1.bf16.msra.mxu0 %v226
    %1506 = vmatprep.subr.bf16.mxu0 %v231
    %1507 = vmatpush1.bf16.msra.mxu0 %v230
    %1508 = vmatprep.subr.bf16.mxu0 %v235
    %1509 = vmatpush1.bf16.msra.mxu0 %v234
    %1510 = vmatprep.subr.bf16.mxu0 %v239
    %1511 = vmatpush1.bf16.msra.mxu0 %v238
    %1512 = vmatprep.subr.bf16.mxu0 %v243
    %1513 = vmatpush1.bf16.msra.mxu0 %v242
    %1514 = vmatprep.subr.bf16.mxu0 0
    %1515 = vmatpush1.bf16.msra.mxu0 0
    %1516 = vmatprep.subr.bf16.mxu0 0
    %1517 = vmatpush1.bf16.msra.mxu0 0
    %1518 = vmatprep.subr.bf16.mxu0 0
    %1519 = vmatpush1.bf16.msra.mxu0 0
    %1520 = vmatprep.subr.bf16.mxu0 0
    %1521 = vmatpush1.bf16.msra.mxu0 0
    %1522 = vmatprep.subr.bf16.mxu0 0
    %1523 = vmatpush1.bf16.msra.mxu0 0
    %1524 = vmatprep.subr.bf16.mxu0 0
    %1525 = vmatpush1.bf16.msra.mxu0 0
    %1526 = vmatprep.subr.bf16.mxu0 0
    %1527 = vmatpush1.bf16.msra.mxu0 0
    %1528 = vmatprep.subr.bf16.mxu0 0
    %1529 = vmatpush1.bf16.msra.mxu0 0
    %1530 = vmatprep.mubr.bf16.mxu0 0
    %1531 = vmatmul.mubr.bf16.gmra.mrb[0].mxu0 %v1497
    %v1532 = vpop.f32.mrb[0].mxu0
    %v1533 = vadd.f32 0.0, %v1532
    %v1534 = vpop.f32.mrb[0].mxu0
    %v1535 = vadd.f32 0.0, %v1534
    %v1536 = vpop.f32.mrb[0].mxu0
    %v1537 = vpop.f32.mrb[0].mxu0
    %1538 = vdwg.mxu0
    %1539 = vmatprep.subr.bf16.mxu0 %v217
    %1540 = vmatpush1.bf16.msra.mxu0 %v216
    %1541 = vmatprep.subr.bf16.mxu0 %v221
    %1542 = vmatpush1.bf16.msra.mxu0 %v220
    %1543 = vmatprep.subr.bf16.mxu0 %v225
    %1544 = vmatpush1.bf16.msra.mxu0 %v224
    %1545 = vmatprep.subr.bf16.mxu0 %v229
    %1546 = vmatpush1.bf16.msra.mxu0 %v228
    %1547 = vmatprep.subr.bf16.mxu0 %v233
    %1548 = vmatpush1.bf16.msra.mxu0 %v232
    %1549 = vmatprep.subr.bf16.mxu0 %v237
    %1550 = vmatpush1.bf16.msra.mxu0 %v236
    %1551 = vmatprep.subr.bf16.mxu0 %v241
    %1552 = vmatpush1.bf16.msra.mxu0 %v240
    %1553 = vmatprep.subr.bf16.mxu0 %v245
    %1554 = vmatpush1.bf16.msra.mxu0 %v244
    %1555 = vmatprep.subr.bf16.mxu0 0
    %1556 = vmatpush1.bf16.msra.mxu0 0
    %1557 = vmatprep.subr.bf16.mxu0 0
    %1558 = vmatpush1.bf16.msra.mxu0 0
    %1559 = vmatprep.subr.bf16.mxu0 0
    %1560 = vmatpush1.bf16.msra.mxu0 0
    %1561 = vmatprep.subr.bf16.mxu0 0
    %1562 = vmatpush1.bf16.msra.mxu0 0
    %1563 = vmatprep.subr.bf16.mxu0 0
    %1564 = vmatpush1.bf16.msra.mxu0 0
    %1565 = vmatprep.subr.bf16.mxu0 0
    %1566 = vmatpush1.bf16.msra.mxu0 0
    %1567 = vmatprep.subr.bf16.mxu0 0
    %1568 = vmatpush1.bf16.msra.mxu0 0
    %1569 = vmatprep.subr.bf16.mxu0 0
    %1570 = vmatpush1.bf16.msra.mxu0 0
    %1571 = vmatprep.mubr.bf16.mxu0 0
    %1572 = vmatmul.mubr.bf16.gmra.mrb[0].mxu0 %v1497
    %v1573 = vpop.f32.mrb[0].mxu0
    %v1574 = vadd.f32 0.0, %v1573
    %v1575 = vpop.f32.mrb[0].mxu0
    %v1576 = vadd.f32 0.0, %v1575
    %v1577 = vpop.f32.mrb[0].mxu0
    %v1578 = vpop.f32.mrb[0].mxu0
    %1579 = vdwg.mxu0
    %v1581 = vsel %vm378, %v1496, 0
    %1583 = vmatprep.subr.bf16.mxu0 %v387
    %1584 = vmatpush1.bf16.msra.mxu0 %v384
    %1585 = vmatprep.subr.bf16.mxu0 0
    %1586 = vmatpush1.bf16.msra.mxu0 0
    %1587 = vmatprep.subr.bf16.mxu0 0
    %1588 = vmatpush1.bf16.msra.mxu0 0
    %1589 = vmatprep.subr.bf16.mxu0 0
    %1590 = vmatpush1.bf16.msra.mxu0 0
    %1591 = vmatprep.subr.bf16.mxu0 0
    %1592 = vmatpush1.bf16.msra.mxu0 0
    %1593 = vmatprep.subr.bf16.mxu0 0
    %1594 = vmatpush1.bf16.msra.mxu0 0
    %1595 = vmatprep.subr.bf16.mxu0 0
    %1596 = vmatpush1.bf16.msra.mxu0 0
    %1597 = vmatprep.subr.bf16.mxu0 0
    %1598 = vmatpush1.bf16.msra.mxu0 0
    %1599 = vmatprep.subr.bf16.mxu0 0
    %1600 = vmatpush1.bf16.msra.mxu0 0
    %1601 = vmatprep.subr.bf16.mxu0 0
    %1602 = vmatpush1.bf16.msra.mxu0 0
    %1603 = vmatprep.subr.bf16.mxu0 0
    %1604 = vmatpush1.bf16.msra.mxu0 0
    %1605 = vmatprep.subr.bf16.mxu0 0
    %1606 = vmatpush1.bf16.msra.mxu0 0
    %1607 = vmatprep.subr.bf16.mxu0 0
    %1608 = vmatpush1.bf16.msra.mxu0 0
    %1609 = vmatprep.subr.bf16.mxu0 0
    %1610 = vmatpush1.bf16.msra.mxu0 0
    %1611 = vmatprep.subr.bf16.mxu0 0
    %1612 = vmatpush1.bf16.msra.mxu0 0
    %1613 = vmatprep.subr.bf16.mxu0 0
    %1614 = vmatpush1.bf16.msra.mxu0 0
    %1615 = vmatprep.mubr.bf16.mxu0 0
    %1616 = vmatmul.mubr.bf16.gmra.mrb[0].mxu0 %v1581
    %v1617 = vpop.f32.mrb[0].mxu0
    %v1618 = vadd.f32 %v1533, %v1617
    %v1619 = vpop.f32.mrb[0].mxu0
    %v1620 = vadd.f32 %v1535, %v1619
    %v1621 = vpop.f32.mrb[0].mxu0
    %v1622 = vpop.f32.mrb[0].mxu0
    %1623 = vdwg.mxu0
    %1624 = vmatprep.subr.bf16.mxu0 %v393
    %1625 = vmatpush1.bf16.msra.mxu0 %v390
    %1626 = vmatprep.subr.bf16.mxu0 0
    %1627 = vmatpush1.bf16.msra.mxu0 0
    %1628 = vmatprep.subr.bf16.mxu0 0
    %1629 = vmatpush1.bf16.msra.mxu0 0
    %1630 = vmatprep.subr.bf16.mxu0 0
    %1631 = vmatpush1.bf16.msra.mxu0 0
    %1632 = vmatprep.subr.bf16.mxu0 0
    %1633 = vmatpush1.bf16.msra.mxu0 0
    %1634 = vmatprep.subr.bf16.mxu0 0
    %1635 = vmatpush1.bf16.msra.mxu0 0
    %1636 = vmatprep.subr.bf16.mxu0 0
    %1637 = vmatpush1.bf16.msra.mxu0 0
    %1638 = vmatprep.subr.bf16.mxu0 0
    %1639 = vmatpush1.bf16.msra.mxu0 0
    %1640 = vmatprep.subr.bf16.mxu0 0
    %1641 = vmatpush1.bf16.msra.mxu0 0
    %1642 = vmatprep.subr.bf16.mxu0 0
    %1643 = vmatpush1.bf16.msra.mxu0 0
    %1644 = vmatprep.subr.bf16.mxu0 0
    %1645 = vmatpush1.bf16.msra.mxu0 0
    %1646 = vmatprep.subr.bf16.mxu0 0
    %1647 = vmatpush1.bf16.msra.mxu0 0
    %1648 = vmatprep.subr.bf16.mxu0 0
    %1649 = vmatpush1.bf16.msra.mxu0 0
    %1650 = vmatprep.subr.bf16.mxu0 0
    %1651 = vmatpush1.bf16.msra.mxu0 0
    %1652 = vmatprep.subr.bf16.mxu0 0
    %1653 = vmatpush1.bf16.msra.mxu0 0
    %1654 = vmatprep.subr.bf16.mxu0 0
    %1655 = vmatpush1.bf16.msra.mxu0 0
    %1656 = vmatprep.mubr.bf16.mxu0 0
    %1657 = vmatmul.mubr.bf16.gmra.mrb[0].mxu0 %v1581
    %v1658 = vpop.f32.mrb[0].mxu0
    %v1659 = vadd.f32 %v1574, %v1658
    %v1660 = vpop.f32.mrb[0].mxu0
    %v1661 = vadd.f32 %v1576, %v1660
    %v1662 = vpop.f32.mrb[0].mxu0
    %v1663 = vpop.f32.mrb[0].mxu0
    %1664 = vdwg.mxu0
    %v1665 = vadd.f32 %v1618, %v97
    %v1666 = vadd.f32 %v1620, %v101
    %v1667 = vadd.f32 %v1659, %v105
    %v1668 = vadd.f32 %v1661, %v109
    %v1669 = vxor.u32 %v1665, 2147483648
    %v1670 = vmul.f32 %v1669, 1.442695
    %v1671 = vpow.pop %v1670
    %v1672 = vadd.f32 %v1671, 1.0
    %v1673 = vrcp.pop %v1672
    %v1674 = vmul.f32 1.0, %v1673
    %v1675 = vxor.u32 %v1666, 2147483648
    %v1676 = vmul.f32 %v1675, 1.442695
    %v1677 = vpow.pop %v1676
    %v1678 = vadd.f32 %v1677, 1.0
    %v1679 = vrcp.pop %v1678
    %v1680 = vmul.f32 1.0, %v1679
    %v1681 = vtanh.pop %v1667
    %v1682 = vxor.u32 %v1668, 2147483648
    %v1683 = vmul.f32 %v1682, 1.442695
    %v1684 = vpow.pop %v1683
    %v1685 = vadd.f32 %v1684, 1.0
    %v1686 = vrcp.pop %v1685
    %v1687 = vmul.f32 1.0, %v1686
    %v1688 = vmul.f32 %v1680, %v1492
    %v1689 = vmul.f32 %v1674, %v1681
    %v1690 = vadd.f32 %v1688, %v1689
    %v1691 = vtanh.pop %v1690
    %v1692 = vmul.f32 %v1687, %v1691
    %s1693 = scalar_lea.vmem %s0, 28
    %v1694 = vld [vmem:[%s1693] sm:$0xf]
    %v1695 = vpack.c.bf16 %v1692, %v1692
    %1696 = vmatprep.subr.bf16.mxu0 %v215
    %1697 = vmatpush1.bf16.msra.mxu0 %v214
    %1698 = vmatprep.subr.bf16.mxu0 %v219
    %1699 = vmatpush1.bf16.msra.mxu0 %v218
    %1700 = vmatprep.subr.bf16.mxu0 %v223
    %1701 = vmatpush1.bf16.msra.mxu0 %v222
    %1702 = vmatprep.subr.bf16.mxu0 %v227
    %1703 = vmatpush1.bf16.msra.mxu0 %v226
    %1704 = vmatprep.subr.bf16.mxu0 %v231
    %1705 = vmatpush1.bf16.msra.mxu0 %v230
    %1706 = vmatprep.subr.bf16.mxu0 %v235
    %1707 = vmatpush1.bf16.msra.mxu0 %v234
    %1708 = vmatprep.subr.bf16.mxu0 %v239
    %1709 = vmatpush1.bf16.msra.mxu0 %v238
    %1710 = vmatprep.subr.bf16.mxu0 %v243
    %1711 = vmatpush1.bf16.msra.mxu0 %v242
    %1712 = vmatprep.subr.bf16.mxu0 0
    %1713 = vmatpush1.bf16.msra.mxu0 0
    %1714 = vmatprep.subr.bf16.mxu0 0
    %1715 = vmatpush1.bf16.msra.mxu0 0
    %1716 = vmatprep.subr.bf16.mxu0 0
    %1717 = vmatpush1.bf16.msra.mxu0 0
    %1718 = vmatprep.subr.bf16.mxu0 0
    %1719 = vmatpush1.bf16.msra.mxu0 0
    %1720 = vmatprep.subr.bf16.mxu0 0
    %1721 = vmatpush1.bf16.msra.mxu0 0
    %1722 = vmatprep.subr.bf16.mxu0 0
    %1723 = vmatpush1.bf16.msra.mxu0 0
    %1724 = vmatprep.subr.bf16.mxu0 0
    %1725 = vmatpush1.bf16.msra.mxu0 0
    %1726 = vmatprep.subr.bf16.mxu0 0
    %1727 = vmatpush1.bf16.msra.mxu0 0
    %1728 = vmatprep.mubr.bf16.mxu0 0
    %1729 = vmatmul.mubr.bf16.gmra.mrb[0].mxu0 %v1695
    %v1730 = vpop.f32.mrb[0].mxu0
    %v1731 = vadd.f32 0.0, %v1730
    %v1732 = vpop.f32.mrb[0].mxu0
    %v1733 = vadd.f32 0.0, %v1732
    %v1734 = vpop.f32.mrb[0].mxu0
    %v1735 = vpop.f32.mrb[0].mxu0
    %1736 = vdwg.mxu0
    %1737 = vmatprep.subr.bf16.mxu0 %v217
    %1738 = vmatpush1.bf16.msra.mxu0 %v216
    %1739 = vmatprep.subr.bf16.mxu0 %v221
    %1740 = vmatpush1.bf16.msra.mxu0 %v220
    %1741 = vmatprep.subr.bf16.mxu0 %v225
    %1742 = vmatpush1.bf16.msra.mxu0 %v224
    %1743 = vmatprep.subr.bf16.mxu0 %v229
    %1744 = vmatpush1.bf16.msra.mxu0 %v228
    %1745 = vmatprep.subr.bf16.mxu0 %v233
    %1746 = vmatpush1.bf16.msra.mxu0 %v232
    %1747 = vmatprep.subr.bf16.mxu0 %v237
    %1748 = vmatpush1.bf16.msra.mxu0 %v236
    %1749 = vmatprep.subr.bf16.mxu0 %v241
    %1750 = vmatpush1.bf16.msra.mxu0 %v240
    %1751 = vmatprep.subr.bf16.mxu0 %v245
    %1752 = vmatpush1.bf16.msra.mxu0 %v244
    %1753 = vmatprep.subr.bf16.mxu0 0
    %1754 = vmatpush1.bf16.msra.mxu0 0
    %1755 = vmatprep.subr.bf16.mxu0 0
    %1756 = vmatpush1.bf16.msra.mxu0 0
    %1757 = vmatprep.subr.bf16.mxu0 0
    %1758 = vmatpush1.bf16.msra.mxu0 0
    %1759 = vmatprep.subr.bf16.mxu0 0
    %1760 = vmatpush1.bf16.msra.mxu0 0
    %1761 = vmatprep.subr.bf16.mxu0 0
    %1762 = vmatpush1.bf16.msra.mxu0 0
    %1763 = vmatprep.subr.bf16.mxu0 0
    %1764 = vmatpush1.bf16.msra.mxu0 0
    %1765 = vmatprep.subr.bf16.mxu0 0
    %1766 = vmatpush1.bf16.msra.mxu0 0
    %1767 = vmatprep.subr.bf16.mxu0 0
    %1768 = vmatpush1.bf16.msra.mxu0 0
    %1769 = vmatprep.mubr.bf16.mxu0 0
    %1770 = vmatmul.mubr.bf16.gmra.mrb[0].mxu0 %v1695
    %v1771 = vpop.f32.mrb[0].mxu0
    %v1772 = vadd.f32 0.0, %v1771
    %v1773 = vpop.f32.mrb[0].mxu0
    %v1774 = vadd.f32 0.0, %v1773
    %v1775 = vpop.f32.mrb[0].mxu0
    %v1776 = vpop.f32.mrb[0].mxu0
    %1777 = vdwg.mxu0
    %v1779 = vsel %vm378, %v1694, 0
    %1781 = vmatprep.subr.bf16.mxu0 %v387
    %1782 = vmatpush1.bf16.msra.mxu0 %v384
    %1783 = vmatprep.subr.bf16.mxu0 0
    %1784 = vmatpush1.bf16.msra.mxu0 0
    %1785 = vmatprep.subr.bf16.mxu0 0
    %1786 = vmatpush1.bf16.msra.mxu0 0
    %1787 = vmatprep.subr.bf16.mxu0 0
    %1788 = vmatpush1.bf16.msra.mxu0 0
    %1789 = vmatprep.subr.bf16.mxu0 0
    %1790 = vmatpush1.bf16.msra.mxu0 0
    %1791 = vmatprep.subr.bf16.mxu0 0
    %1792 = vmatpush1.bf16.msra.mxu0 0
    %1793 = vmatprep.subr.bf16.mxu0 0
    %1794 = vmatpush1.bf16.msra.mxu0 0
    %1795 = vmatprep.subr.bf16.mxu0 0
    %1796 = vmatpush1.bf16.msra.mxu0 0
    %1797 = vmatprep.subr.bf16.mxu0 0
    %1798 = vmatpush1.bf16.msra.mxu0 0
    %1799 = vmatprep.subr.bf16.mxu0 0
    %1800 = vmatpush1.bf16.msra.mxu0 0
    %1801 = vmatprep.subr.bf16.mxu0 0
    %1802 = vmatpush1.bf16.msra.mxu0 0
    %1803 = vmatprep.subr.bf16.mxu0 0
    %1804 = vmatpush1.bf16.msra.mxu0 0
    %1805 = vmatprep.subr.bf16.mxu0 0
    %1806 = vmatpush1.bf16.msra.mxu0 0
    %1807 = vmatprep.subr.bf16.mxu0 0
    %1808 = vmatpush1.bf16.msra.mxu0 0
    %1809 = vmatprep.subr.bf16.mxu0 0
    %1810 = vmatpush1.bf16.msra.mxu0 0
    %1811 = vmatprep.subr.bf16.mxu0 0
    %1812 = vmatpush1.bf16.msra.mxu0 0
    %1813 = vmatprep.mubr.bf16.mxu0 0
    %1814 = vmatmul.mubr.bf16.gmra.mrb[0].mxu0 %v1779
    %v1815 = vpop.f32.mrb[0].mxu0
    %v1816 = vadd.f32 %v1731, %v1815
    %v1817 = vpop.f32.mrb[0].mxu0
    %v1818 = vadd.f32 %v1733, %v1817
    %v1819 = vpop.f32.mrb[0].mxu0
    %v1820 = vpop.f32.mrb[0].mxu0
    %1821 = vdwg.mxu0
    %1822 = vmatprep.subr.bf16.mxu0 %v393
    %1823 = vmatpush1.bf16.msra.mxu0 %v390
    %1824 = vmatprep.subr.bf16.mxu0 0
    %1825 = vmatpush1.bf16.msra.mxu0 0
    %1826 = vmatprep.subr.bf16.mxu0 0
    %1827 = vmatpush1.bf16.msra.mxu0 0
    %1828 = vmatprep.subr.bf16.mxu0 0
    %1829 = vmatpush1.bf16.msra.mxu0 0
    %1830 = vmatprep.subr.bf16.mxu0 0
    %1831 = vmatpush1.bf16.msra.mxu0 0
    %1832 = vmatprep.subr.bf16.mxu0 0
    %1833 = vmatpush1.bf16.msra.mxu0 0
    %1834 = vmatprep.subr.bf16.mxu0 0
    %1835 = vmatpush1.bf16.msra.mxu0 0
    %1836 = vmatprep.subr.bf16.mxu0 0
    %1837 = vmatpush1.bf16.msra.mxu0 0
    %1838 = vmatprep.subr.bf16.mxu0 0
    %1839 = vmatpush1.bf16.msra.mxu0 0
    %1840 = vmatprep.subr.bf16.mxu0 0
    %1841 = vmatpush1.bf16.msra.mxu0 0
    %1842 = vmatprep.subr.bf16.mxu0 0
    %1843 = vmatpush1.bf16.msra.mxu0 0
    %1844 = vmatprep.subr.bf16.mxu0 0
    %1845 = vmatpush1.bf16.msra.mxu0 0
    %1846 = vmatprep.subr.bf16.mxu0 0
    %1847 = vmatpush1.bf16.msra.mxu0 0
    %1848 = vmatprep.subr.bf16.mxu0 0
    %1849 = vmatpush1.bf16.msra.mxu0 0
    %1850 = vmatprep.subr.bf16.mxu0 0
    %1851 = vmatpush1.bf16.msra.mxu0 0
    %1852 = vmatprep.subr.bf16.mxu0 0
    %1853 = vmatpush1.bf16.msra.mxu0 0
    %1854 = vmatprep.mubr.bf16.mxu0 0
    %1855 = vmatmul.mubr.bf16.gmra.mrb[0].mxu0 %v1779
    %v1856 = vpop.f32.mrb[0].mxu0
    %v1857 = vadd.f32 %v1772, %v1856
    %v1858 = vpop.f32.mrb[0].mxu0
    %v1859 = vadd.f32 %v1774, %v1858
    %v1860 = vpop.f32.mrb[0].mxu0
    %v1861 = vpop.f32.mrb[0].mxu0
    %1862 = vdwg.mxu0
    %v1863 = vadd.f32 %v1816, %v97
    %v1864 = vadd.f32 %v1818, %v101
    %v1865 = vadd.f32 %v1857, %v105
    %v1866 = vadd.f32 %v1859, %v109
    %v1867 = vxor.u32 %v1863, 2147483648
    %v1868 = vmul.f32 %v1867, 1.442695
    %v1869 = vpow.pop %v1868
    %v1870 = vadd.f32 %v1869, 1.0
    %v1871 = vrcp.pop %v1870
    %v1872 = vmul.f32 1.0, %v1871
    %v1873 = vxor.u32 %v1864, 2147483648
    %v1874 = vmul.f32 %v1873, 1.442695
    %v1875 = vpow.pop %v1874
    %v1876 = vadd.f32 %v1875, 1.0
    %v1877 = vrcp.pop %v1876
    %v1878 = vmul.f32 1.0, %v1877
    %v1879 = vtanh.pop %v1865
    %v1880 = vxor.u32 %v1866, 2147483648
    %v1881 = vmul.f32 %v1880, 1.442695
    %v1882 = vpow.pop %v1881
    %v1883 = vadd.f32 %v1882, 1.0
    %v1884 = vrcp.pop %v1883
    %v1885 = vmul.f32 1.0, %v1884
    %v1886 = vmul.f32 %v1878, %v1690
    %v1887 = vmul.f32 %v1872, %v1879
    %v1888 = vadd.f32 %v1886, %v1887
    %v1889 = vtanh.pop %v1888
    %v1890 = vmul.f32 %v1885, %v1889
    %1891 = vst [vmem:[#allocation2] sm:$0xff] %v1890
    %1892 = vst [vmem:[#allocation3] sm:$0xff] %v1888
    // Predicated region
    $region38: #{tpu_custom_call.1} parent=1 // pred_check
      %p1893 = pneg %p53
    $region39: #{tpu_custom_call.1} parent=1 // pred_check_branch
      %1895 = sbr.rel (%p1893) target = $region41
    $region40: #{tpu_custom_call.1} parent=1 // pred_region
      %v1896 = vpack.c.bf16 %v1890, %v1890
      %v1897 = vld [vmem:[#allocation7] sm:$0xf]
      %v1898 = vld [vmem:[#allocation7 + $0x4] sm:$0xf]
      %v1899 = vld [vmem:[#allocation7 + $0x8] sm:$0xf]
      %v1900 = vld [vmem:[#allocation7 + $0xc] sm:$0xf]
      %v1901 = vld [vmem:[#allocation7 + $0x10] sm:$0xf]
      %v1902 = vld [vmem:[#allocation7 + $0x14] sm:$0xf]
      %v1903 = vld [vmem:[#allocation7 + $0x18] sm:$0xf]
      %v1904 = vld [vmem:[#allocation7 + $0x1c] sm:$0xf]
      %v1905 = vld [vmem:[#allocation7 + $0x20] sm:$0xf]
      %v1906 = vld [vmem:[#allocation7 + $0x24] sm:$0xf]
      %v1907 = vld [vmem:[#allocation7 + $0x28] sm:$0xf]
      %v1908 = vld [vmem:[#allocation7 + $0x2c] sm:$0xf]
      %v1909 = vld [vmem:[#allocation7 + $0x30] sm:$0xf]
      %v1910 = vld [vmem:[#allocation7 + $0x34] sm:$0xf]
      %v1911 = vld [vmem:[#allocation7 + $0x38] sm:$0xf]
      %v1912 = vld [vmem:[#allocation7 + $0x3c] sm:$0xf]
      %v1913 = vld [vmem:[%s5] sm:$0x1]
      %v1915 = vlaneseq
      %v1916 = vshrl.u32 %v1915, 7
      %v1917 = vsub.s32 0, %v1916
      %v1918 = vrot.slane %v1913, %v1917
      %v1936 = vunpack.c.l.b16 %v1897
      %v1937 = vunpack.c.l.b16 %v1898
      %v1938 = vunpack.c.l.b16 %v1899
      %v1939 = vunpack.c.l.b16 %v1900
      %v1940 = vunpack.c.l.b16 %v1901
      %v1941 = vunpack.c.l.b16 %v1902
      %v1942 = vunpack.c.l.b16 %v1903
      %v1943 = vunpack.c.l.b16 %v1904
      %v1944 = vunpack.c.l.b16 %v1905
      %v1945 = vunpack.c.l.b16 %v1906
      %v1946 = vunpack.c.l.b16 %v1907
      %v1947 = vunpack.c.l.b16 %v1908
      %v1948 = vunpack.c.l.b16 %v1909
      %v1949 = vunpack.c.l.b16 %v1910
      %v1950 = vunpack.c.l.b16 %v1911
      %v1951 = vunpack.c.l.b16 %v1912
      %v1952 = vpack.c.b16 %v1937, %v1936
      %v1953 = vpack.c.b16 %v1939, %v1938
      %v1954 = vpack.c.b16 %v1941, %v1940
      %v1955 = vpack.c.b16 %v1943, %v1942
      %v1956 = vpack.c.b16 %v1945, %v1944
      %v1957 = vpack.c.b16 %v1947, %v1946
      %v1958 = vpack.c.b16 %v1949, %v1948
      %v1959 = vpack.c.b16 %v1951, %v1950
      %1968 = vmatprep.subr.bf16.mxu0 0
      %1969 = vmatpush1.bf16.msra.mxu0 %v1952
      %1970 = vmatprep.subr.bf16.mxu0 0
      %1971 = vmatpush1.bf16.msra.mxu0 %v1953
      %1972 = vmatprep.subr.bf16.mxu0 0
      %1973 = vmatpush1.bf16.msra.mxu0 %v1954
      %1974 = vmatprep.subr.bf16.mxu0 0
      %1975 = vmatpush1.bf16.msra.mxu0 %v1955
      %1976 = vmatprep.subr.bf16.mxu0 0
      %1977 = vmatpush1.bf16.msra.mxu0 %v1956
      %1978 = vmatprep.subr.bf16.mxu0 0
      %1979 = vmatpush1.bf16.msra.mxu0 %v1957
      %1980 = vmatprep.subr.bf16.mxu0 0
      %1981 = vmatpush1.bf16.msra.mxu0 %v1958
      %1982 = vmatprep.subr.bf16.mxu0 0
      %1983 = vmatpush1.bf16.msra.mxu0 %v1959
      %1984 = vmatprep.subr.bf16.mxu0 0
      %1985 = vmatpush1.bf16.msra.mxu0 0
      %1986 = vmatprep.subr.bf16.mxu0 0
      %1987 = vmatpush1.bf16.msra.mxu0 0
      %1988 = vmatprep.subr.bf16.mxu0 0
      %1989 = vmatpush1.bf16.msra.mxu0 0
      %1990 = vmatprep.subr.bf16.mxu0 0
      %1991 = vmatpush1.bf16.msra.mxu0 0
      %1992 = vmatprep.subr.bf16.mxu0 0
      %1993 = vmatpush1.bf16.msra.mxu0 0
      %1994 = vmatprep.subr.bf16.mxu0 0
      %1995 = vmatpush1.bf16.msra.mxu0 0
      %1996 = vmatprep.subr.bf16.mxu0 0
      %1997 = vmatpush1.bf16.msra.mxu0 0
      %1998 = vmatprep.subr.bf16.mxu0 0
      %1999 = vmatpush1.bf16.msra.mxu0 0
      %2000 = vmatprep.mubr.bf16.mxu0 0
      %2001 = vmatmul.mubr.bf16.gmra.mrb[0].mxu0 %v1896
      %v2002 = vpop.f32.mrb[0].mxu0
      %v2003 = vadd.f32 %v1918, %v2002
      %v2004 = vpop.f32.mrb[0].mxu0
      %v2005 = vpop.f32.mrb[0].mxu0
      %v2006 = vpop.f32.mrb[0].mxu0
      %2007 = vdwg.mxu0
      %2008 = vst [vmem:[#allocation9] sm:$0xff] %v2003
    $region41: #{tpu_custom_call.1} parent=1 // pred_fallthru
      _
    // Predicated region
    $region42: #{tpu_custom_call.1} parent=1 // pred_check
      _
    $region43: #{tpu_custom_call.1} parent=1 // pred_check_branch
      %2010 = sbr.rel (0) target = $region45
    $region44: #{tpu_custom_call.1} parent=1 // pred_region
      %s2012 = ssub.s32 128, 128
      %2013 = vsyncadd [#allocation6], %s2012
      %s2015 = sshll.u32 [#allocation9], 4
      %s2016 = int_to_ptr.vmem [resolvable:$true] %s2015
      %2018 = dma.vmem_to_hbm [thread:$0]  %s2016, 128, %s6, [#allocation6]
    $region45: #{tpu_custom_call.1} parent=1 // pred_fallthru
      _
    // Predicated region
    $region46: #{tpu_custom_call.1} parent=1 // pred_check
      _
    $region47: #{tpu_custom_call.1} parent=1 // pred_check_branch
      %2020 = sbr.rel (0) target = $region49
    $region48: #{tpu_custom_call.1} parent=1 // pred_region
      %2021 = dma.done [#allocation6], 128
    $region49: #{tpu_custom_call.1} parent=1 // pred_fallthru
      _
    %2022 = vsyncpa [#allocation5], 1
    %2023 = vsyncpa [#allocation8], 1
    %2024 = vsyncpa [#allocation6], 1

</llo_original>
